<compile_context>
chip_gen: v7x
topology: tpu7x:2x2x1
jax: 0.10.0
libtpu: 0.0.40
codegen_flags: <defaults>
</compile_context>

<pallas_src>
import functools

import jax
import jax.numpy as jnp
from jax import lax
from jax.experimental import pallas as pl
from jax.experimental.pallas import tpu as pltpu


# ----------------------------------------------------------------------------
# Kernel: one grid step = one batch tile; all layers & heads run in-kernel.
# ----------------------------------------------------------------------------
def _transformer_f_kernel(z_ref, qt_ref, pt_ref, o_ref, *,
                          n_layer, n_head, inv_n, matmul_dtype):
    z = z_ref[...]                        # (Bt, S, D) float32, carried across layers
    s = z.shape[1]
    n_keep = s - 1                        # rows entering the Gram matrix (the A mask)

    if n_keep % 8 == 0 and n_keep > 0:
        # Sublane-aligned slice: equivalent to applying A (zero last row) on
        # both operands of the Gram contraction, without a mask or extra copy.
        def key_rows(x):
            return x[:, :n_keep, :]
    else:
        keep = (lax.broadcasted_iota(jnp.int32, (1, s, 1), 1) < n_keep)
        keep = keep.astype(jnp.float32)

        def key_rows(x):
            return x * keep

    # Statically unrolled: n_layer is small for this module.  For very deep
    # stacks this could become a lax.fori_loop with dynamic parameter indexing.
    for l in range(n_layer):
        zk = key_rows(z).astype(matmul_dtype)
        # G_b = Z_b[:N]^T Z_b[:N]   (Bt, D, D), symmetric.
        g = jnp.einsum('bse,bsf->bef', zk, zk,
                       preferred_element_type=jnp.float32)
        g_m = g.astype(matmul_dtype)

        # mt[b, i, p] accumulates sum_j (Q_j G_b P_j^T)[p, i]  (i.e. M_b^T) so
        # that every contraction below keeps its natural dot_general order.
        mt = jnp.zeros_like(g)
        for j in range(n_head):
            pt_lj = pt_ref[l, j].astype(matmul_dtype)     # (D, D) = P_j^T
            qt_lj = qt_ref[l, j].astype(matmul_dtype)     # (D, D) = Q_j^T
            k = jnp.einsum('bef,fi->bei', g_m, pt_lj,
                           preferred_element_type=jnp.float32)    # G_b P_j^T
            mt = mt + jnp.einsum('bei,ep->bip', k.astype(matmul_dtype), qt_lj,
                                 preferred_element_type=jnp.float32)

        # Z <- Z + (Z M_b) / N ; contraction over the shared 'p' axis.
        upd = jnp.einsum('bnp,bip->bni', z.astype(matmul_dtype),
                         mt.astype(matmul_dtype),
                         preferred_element_type=jnp.float32)
        z = z + upd * inv_n

    o_ref[...] = z.astype(o_ref.dtype)


# ----------------------------------------------------------------------------
# Wrapper
# ----------------------------------------------------------------------------
def _vmem_limit_bytes():
    """~3/4 of physical VMEM, capped at 100 MiB (96 MiB v5e/v6e, 48 MiB v7x)."""
    try:
        cap = int(pltpu.get_tpu_info().vmem_capacity_bytes)
    except Exception:
        cap = 64 * 1024 * 1024            # conservative fallback (v7x-sized)
    return min((cap * 3) // 4, 100 * 1024 * 1024)


def _pick_batch_tile(b, s, d, vmem_limit):
    # Roughly 5+ live copies of a block per grid step (2x in + 2x out
    # double-buffers plus in-kernel temporaries), so keep one block to ~1/8 of
    # the VMEM budget.
    block_budget = min(vmem_limit // 8, 12 * 1024 * 1024)
    per_batch = s * d * 4
    bt = max(1, min(b, block_budget // per_batch))
    if b >= 2:
        # v7x megacore: keep at least two grid steps so both TensorCores work.
        bt = min(bt, max(1, b // 2))
    return bt


def transformer_f_forward(Z, allparam, *, n_layer=None, n_head=None,
                          batch_tile=None, matmul_dtype=jnp.float32):
    Z = jnp.asarray(Z, jnp.float32)
    allparam = jnp.asarray(allparam, jnp.float32)
    B, S, D = Z.shape
    if n_layer is None:
        n_layer = allparam.shape[0]
    if n_head is None:
        n_head = allparam.shape[1]
    N = S - 1

    # Trace-time (free) parameter prep: pre-transpose P and Q so the kernel
    # only ever right-multiplies with natural-order contractions.
    P = allparam[:n_layer, :n_head, 0]                     # (L, H, D, D)
    Q = allparam[:n_layer, :n_head, 1]                     # (L, H, D, D)
    PT = jnp.swapaxes(P, -1, -2).astype(matmul_dtype)      # P_j^T
    QT = jnp.swapaxes(Q, -1, -2).astype(matmul_dtype)      # Q_j^T

    vmem_limit = _vmem_limit_bytes()
    if batch_tile is None:
        batch_tile = _pick_batch_tile(B, S, D, vmem_limit)
    batch_tile = max(1, min(batch_tile, B))

    # Pad the batch up to a multiple of the tile (avoids the batch_tile=1
    # cliff for awkward batch sizes); padded rows stay zero and are sliced off.
    n_tiles = -(-B // batch_tile)
    b_pad = n_tiles * batch_tile
    Zp = Z if b_pad == B else jnp.pad(Z, ((0, b_pad - B), (0, 0), (0, 0)))

    kernel = functools.partial(
        _transformer_f_kernel, n_layer=n_layer, n_head=n_head,
        inv_n=1.0 / N, matmul_dtype=matmul_dtype)

    out = pl.pallas_call(
        kernel,
        out_shape=jax.ShapeDtypeStruct((b_pad, S, D), jnp.float32),
        grid_spec=pltpu.PrefetchScalarGridSpec(
            num_scalar_prefetch=0,
            grid=(n_tiles,),
            in_specs=[
                # Z: one batch tile per grid step.
                pl.BlockSpec((batch_tile, S, D), lambda b: (b, 0, 0)),
                # Parameters: full arrays with a constant block index ->
                # DMA'd once and kept resident in VMEM across the whole grid.
                pl.BlockSpec((n_layer, n_head, D, D), lambda b: (0, 0, 0, 0)),
                pl.BlockSpec((n_layer, n_head, D, D), lambda b: (0, 0, 0, 0)),
            ],
            out_specs=pl.BlockSpec((batch_tile, S, D), lambda b: (b, 0, 0)),
        ),
        compiler_params=pltpu.CompilerParams(
            dimension_semantics=("parallel",),
            vmem_limit_bytes=vmem_limit,
        ),
        input_output_aliases={0: 0},   # donate Z's HBM buffer to the output
    )(Zp, QT, PT)

    return out if b_pad == B else out[:B]


# ----------------------------------------------------------------------------
# Pure-JAX reference (direct transcription of the PyTorch spec) for validation
# ----------------------------------------------------------------------------
def reference_forward(Z, allparam, *, n_layer, n_head):
    B, S, D = Z.shape
    N = S - 1
    A = jnp.eye(S, dtype=jnp.float32).at[N, N].set(0.0)
    z = Z
    for i in range(n_layer):
        zi = z
        res = jnp.zeros_like(zi)
        for j in range(n_head):
            Pij = allparam[i, j, 0]
            Qij = allparam[i, j, 1]
            attn = jnp.einsum('BNi,ij,BMj->BNM', zi, Qij, zi)
            key = jnp.einsum('ij,BNj->BNi', Pij, zi)
            out = jnp.einsum('BNM,ML,BLi->BNi', attn, A, key) / N
            res = res + out
        z = zi + res
    return z


if __name__ == "__main__":
    # Small shapes consistent with the module: B=2, N=8 contexts, d=4 features.
    B, N, d = 2, 8, 4
    n_layer, n_head = 3, 2
    var = 0.1
    S, D = N + 1, d + 1

    key = jax.random.PRNGKey(0)
    kz, kp = jax.random.split(key)
    Z = jax.random.normal(kz, (B, S, D), jnp.float32)
    allparam = jax.random.normal(kp, (n_layer, n_head, 2, D, D), jnp.float32) * var

    # Reference first (the kernel call may donate Z's buffer via aliasing).
    ref = jax.block_until_ready(
        reference_forward(Z, allparam, n_layer=n_layer, n_head=n_head))

    out = jax.block_until_ready(
        transformer_f_forward(Z, allparam, n_layer=n_layer, n_head=n_head))

    assert out.shape == (B, S, D), out.shape
    max_err = float(jnp.max(jnp.abs(out - ref)))
    assert jnp.allclose(out, ref, rtol=1e-3, atol=1e-3), max_err
    print("KERNEL_OK")
</pallas_src>

<mosaic_0001>
module attributes {stable_mosaic.version = 11 : i64} {
  func.func @_transformer_f_kernel(%arg0: i32, %arg1: memref<1x9x5xf32, #tpu.memory_space<vmem>>, %arg2: memref<3x2x5x5xf32, #tpu.memory_space<vmem>>, %arg3: memref<3x2x5x5xf32, #tpu.memory_space<vmem>>, %arg4: memref<1x9x5xf32, #tpu.memory_space<vmem>>) attributes {dimension_semantics = [#tpu.dimension_semantics<parallel>], iteration_bounds = array<i64: 2>, scalar_prefetch = 0 : i64, scratch_operands = 0 : i64, tpu.core_type = #tpu.core_type<tc>, window_params = [{transform_indices = @transform_0, window_bounds = array<i64: 1, 9, 5>}, {pipeline_mode = #tpu.pipeline_mode<synchronous>, transform_indices = @transform_1, window_bounds = array<i64: 3, 2, 5, 5>}, {pipeline_mode = #tpu.pipeline_mode<synchronous>, transform_indices = @transform_2, window_bounds = array<i64: 3, 2, 5, 5>}, {transform_indices = @transform_3, window_bounds = array<i64: 1, 9, 5>}]} {
    %c0 = arith.constant 0 : index
    %c0_0 = arith.constant 0 : index
    %c0_1 = arith.constant 0 : index
    %0 = vector.load %arg1[%c0, %c0_0, %c0_1] : memref<1x9x5xf32, #tpu.memory_space<vmem>>, vector<1x9x5xf32>
    %1 = vector.extract_strided_slice %0 {offsets = [0, 0, 0], sizes = [1, 8, 5], strides = [1, 1, 1]} : vector<1x9x5xf32> to vector<1x8x5xf32>
    "tpu.trace_start"() <{level = 10 : i32, message = "bse,bsf->bef"}> : () -> ()
    %cst = arith.constant dense<0.000000e+00> : vector<1x5x5xf32>
    %2 = tpu.matmul %1, %1, %cst {dimension_numbers = #tpu.dot_dimension_numbers<[1], [1], [2], [2], [0, 0, 0, 2, 1, 2], [0], [0]>} : vector<1x8x5xf32>, vector<1x8x5xf32>, vector<1x5x5xf32> -> vector<1x5x5xf32>
    %cst_2 = arith.constant 0.000000e+00 : f32
    "tpu.trace_stop"() : () -> ()
    %3 = vector.broadcast %cst_2 : f32 to vector<1x5x5xf32>
    %c0_3 = arith.constant 0 : index
    %c0_4 = arith.constant 0 : index
    %c0_5 = arith.constant 0 : index
    %c0_6 = arith.constant 0 : index
    %4 = vector.load %arg3[%c0_3, %c0_4, %c0_5, %c0_6] : memref<3x2x5x5xf32, #tpu.memory_space<vmem>>, vector<1x1x5x5xf32>
    %5 = vector.shape_cast %4 : vector<1x1x5x5xf32> to vector<5x5xf32>
    %c0_7 = arith.constant 0 : index
    %c0_8 = arith.constant 0 : index
    %c0_9 = arith.constant 0 : index
    %c0_10 = arith.constant 0 : index
    %6 = vector.load %arg2[%c0_7, %c0_8, %c0_9, %c0_10] : memref<3x2x5x5xf32, #tpu.memory_space<vmem>>, vector<1x1x5x5xf32>
    %7 = vector.shape_cast %6 : vector<1x1x5x5xf32> to vector<5x5xf32>
    "tpu.trace_start"() <{level = 10 : i32, message = "bef,fi->bei"}> : () -> ()
    %cst_11 = arith.constant dense<0.000000e+00> : vector<1x5x5xf32>
    %8 = tpu.matmul %2, %5, %cst_11 {dimension_numbers = #tpu.dot_dimension_numbers<[2], [0], [0, 1], [1], [0, 0, 0, 1, 1, 1], [], []>} : vector<1x5x5xf32>, vector<5x5xf32>, vector<1x5x5xf32> -> vector<1x5x5xf32>
    "tpu.trace_stop"() : () -> ()
    "tpu.trace_start"() <{level = 10 : i32, message = "bei,ep->bip"}> : () -> ()
    %cst_12 = arith.constant dense<0.000000e+00> : vector<1x5x5xf32>
    %9 = tpu.matmul %8, %7, %cst_12 {dimension_numbers = #tpu.dot_dimension_numbers<[1], [0], [0, 2], [1], [0, 0, 0, 2, 1, 1], [], []>} : vector<1x5x5xf32>, vector<5x5xf32>, vector<1x5x5xf32> -> vector<1x5x5xf32>
    "tpu.trace_stop"() : () -> ()
    %10 = arith.addf %3, %9 : vector<1x5x5xf32>
    %c0_13 = arith.constant 0 : index
    %c1 = arith.constant 1 : index
    %c0_14 = arith.constant 0 : index
    %c0_15 = arith.constant 0 : index
    %11 = vector.load %arg3[%c0_13, %c1, %c0_14, %c0_15] : memref<3x2x5x5xf32, #tpu.memory_space<vmem>>, vector<1x1x5x5xf32>
    %12 = vector.shape_cast %11 : vector<1x1x5x5xf32> to vector<5x5xf32>
    %c0_16 = arith.constant 0 : index
    %c1_17 = arith.constant 1 : index
    %c0_18 = arith.constant 0 : index
    %c0_19 = arith.constant 0 : index
    %13 = vector.load %arg2[%c0_16, %c1_17, %c0_18, %c0_19] : memref<3x2x5x5xf32, #tpu.memory_space<vmem>>, vector<1x1x5x5xf32>
    %14 = vector.shape_cast %13 : vector<1x1x5x5xf32> to vector<5x5xf32>
    "tpu.trace_start"() <{level = 10 : i32, message = "bef,fi->bei"}> : () -> ()
    %cst_20 = arith.constant dense<0.000000e+00> : vector<1x5x5xf32>
    %15 = tpu.matmul %2, %12, %cst_20 {dimension_numbers = #tpu.dot_dimension_numbers<[2], [0], [0, 1], [1], [0, 0, 0, 1, 1, 1], [], []>} : vector<1x5x5xf32>, vector<5x5xf32>, vector<1x5x5xf32> -> vector<1x5x5xf32>
    "tpu.trace_stop"() : () -> ()
    "tpu.trace_start"() <{level = 10 : i32, message = "bei,ep->bip"}> : () -> ()
    %cst_21 = arith.constant dense<0.000000e+00> : vector<1x5x5xf32>
    %16 = tpu.matmul %15, %14, %cst_21 {dimension_numbers = #tpu.dot_dimension_numbers<[1], [0], [0, 2], [1], [0, 0, 0, 2, 1, 1], [], []>} : vector<1x5x5xf32>, vector<5x5xf32>, vector<1x5x5xf32> -> vector<1x5x5xf32>
    "tpu.trace_stop"() : () -> ()
    %17 = arith.addf %10, %16 : vector<1x5x5xf32>
    "tpu.trace_start"() <{level = 10 : i32, message = "bnp,bip->bni"}> : () -> ()
    %cst_22 = arith.constant dense<0.000000e+00> : vector<1x9x5xf32>
    %18 = tpu.matmul %0, %17, %cst_22 {dimension_numbers = #tpu.dot_dimension_numbers<[2], [2], [1], [1], [0, 0, 0, 1, 1, 1], [0], [0]>} : vector<1x9x5xf32>, vector<1x5x5xf32>, vector<1x9x5xf32> -> vector<1x9x5xf32>
    "tpu.trace_stop"() : () -> ()
    %cst_23 = arith.constant 1.250000e-01 : f32
    %19 = vector.broadcast %cst_23 : f32 to vector<1x9x5xf32>
    %20 = arith.mulf %18, %19 : vector<1x9x5xf32>
    %21 = arith.addf %0, %20 : vector<1x9x5xf32>
    %22 = vector.extract_strided_slice %21 {offsets = [0, 0, 0], sizes = [1, 8, 5], strides = [1, 1, 1]} : vector<1x9x5xf32> to vector<1x8x5xf32>
    "tpu.trace_start"() <{level = 10 : i32, message = "bse,bsf->bef"}> : () -> ()
    %cst_24 = arith.constant dense<0.000000e+00> : vector<1x5x5xf32>
    %23 = tpu.matmul %22, %22, %cst_24 {dimension_numbers = #tpu.dot_dimension_numbers<[1], [1], [2], [2], [0, 0, 0, 2, 1, 2], [0], [0]>} : vector<1x8x5xf32>, vector<1x8x5xf32>, vector<1x5x5xf32> -> vector<1x5x5xf32>
    %cst_25 = arith.constant 0.000000e+00 : f32
    "tpu.trace_stop"() : () -> ()
    %24 = vector.broadcast %cst_25 : f32 to vector<1x5x5xf32>
    %c1_26 = arith.constant 1 : index
    %c0_27 = arith.constant 0 : index
    %c0_28 = arith.constant 0 : index
    %c0_29 = arith.constant 0 : index
    %25 = vector.load %arg3[%c1_26, %c0_27, %c0_28, %c0_29] : memref<3x2x5x5xf32, #tpu.memory_space<vmem>>, vector<1x1x5x5xf32>
    %26 = vector.shape_cast %25 : vector<1x1x5x5xf32> to vector<5x5xf32>
    %c1_30 = arith.constant 1 : index
    %c0_31 = arith.constant 0 : index
    %c0_32 = arith.constant 0 : index
    %c0_33 = arith.constant 0 : index
    %27 = vector.load %arg2[%c1_30, %c0_31, %c0_32, %c0_33] : memref<3x2x5x5xf32, #tpu.memory_space<vmem>>, vector<1x1x5x5xf32>
    %28 = vector.shape_cast %27 : vector<1x1x5x5xf32> to vector<5x5xf32>
    "tpu.trace_start"() <{level = 10 : i32, message = "bef,fi->bei"}> : () -> ()
    %cst_34 = arith.constant dense<0.000000e+00> : vector<1x5x5xf32>
    %29 = tpu.matmul %23, %26, %cst_34 {dimension_numbers = #tpu.dot_dimension_numbers<[2], [0], [0, 1], [1], [0, 0, 0, 1, 1, 1], [], []>} : vector<1x5x5xf32>, vector<5x5xf32>, vector<1x5x5xf32> -> vector<1x5x5xf32>
    "tpu.trace_stop"() : () -> ()
    "tpu.trace_start"() <{level = 10 : i32, message = "bei,ep->bip"}> : () -> ()
    %cst_35 = arith.constant dense<0.000000e+00> : vector<1x5x5xf32>
    %30 = tpu.matmul %29, %28, %cst_35 {dimension_numbers = #tpu.dot_dimension_numbers<[1], [0], [0, 2], [1], [0, 0, 0, 2, 1, 1], [], []>} : vector<1x5x5xf32>, vector<5x5xf32>, vector<1x5x5xf32> -> vector<1x5x5xf32>
    "tpu.trace_stop"() : () -> ()
    %31 = arith.addf %24, %30 : vector<1x5x5xf32>
    %c1_36 = arith.constant 1 : index
    %c1_37 = arith.constant 1 : index
    %c0_38 = arith.constant 0 : index
    %c0_39 = arith.constant 0 : index
    %32 = vector.load %arg3[%c1_36, %c1_37, %c0_38, %c0_39] : memref<3x2x5x5xf32, #tpu.memory_space<vmem>>, vector<1x1x5x5xf32>
    %33 = vector.shape_cast %32 : vector<1x1x5x5xf32> to vector<5x5xf32>
    %c1_40 = arith.constant 1 : index
    %c1_41 = arith.constant 1 : index
    %c0_42 = arith.constant 0 : index
    %c0_43 = arith.constant 0 : index
    %34 = vector.load %arg2[%c1_40, %c1_41, %c0_42, %c0_43] : memref<3x2x5x5xf32, #tpu.memory_space<vmem>>, vector<1x1x5x5xf32>
    %35 = vector.shape_cast %34 : vector<1x1x5x5xf32> to vector<5x5xf32>
    "tpu.trace_start"() <{level = 10 : i32, message = "bef,fi->bei"}> : () -> ()
    %cst_44 = arith.constant dense<0.000000e+00> : vector<1x5x5xf32>
    %36 = tpu.matmul %23, %33, %cst_44 {dimension_numbers = #tpu.dot_dimension_numbers<[2], [0], [0, 1], [1], [0, 0, 0, 1, 1, 1], [], []>} : vector<1x5x5xf32>, vector<5x5xf32>, vector<1x5x5xf32> -> vector<1x5x5xf32>
    "tpu.trace_stop"() : () -> ()
    "tpu.trace_start"() <{level = 10 : i32, message = "bei,ep->bip"}> : () -> ()
    %cst_45 = arith.constant dense<0.000000e+00> : vector<1x5x5xf32>
    %37 = tpu.matmul %36, %35, %cst_45 {dimension_numbers = #tpu.dot_dimension_numbers<[1], [0], [0, 2], [1], [0, 0, 0, 2, 1, 1], [], []>} : vector<1x5x5xf32>, vector<5x5xf32>, vector<1x5x5xf32> -> vector<1x5x5xf32>
    "tpu.trace_stop"() : () -> ()
    %38 = arith.addf %31, %37 : vector<1x5x5xf32>
    "tpu.trace_start"() <{level = 10 : i32, message = "bnp,bip->bni"}> : () -> ()
    %cst_46 = arith.constant dense<0.000000e+00> : vector<1x9x5xf32>
    %39 = tpu.matmul %21, %38, %cst_46 {dimension_numbers = #tpu.dot_dimension_numbers<[2], [2], [1], [1], [0, 0, 0, 1, 1, 1], [0], [0]>} : vector<1x9x5xf32>, vector<1x5x5xf32>, vector<1x9x5xf32> -> vector<1x9x5xf32>
    "tpu.trace_stop"() : () -> ()
    %cst_47 = arith.constant 1.250000e-01 : f32
    %40 = vector.broadcast %cst_47 : f32 to vector<1x9x5xf32>
    %41 = arith.mulf %39, %40 : vector<1x9x5xf32>
    %42 = arith.addf %21, %41 : vector<1x9x5xf32>
    %43 = vector.extract_strided_slice %42 {offsets = [0, 0, 0], sizes = [1, 8, 5], strides = [1, 1, 1]} : vector<1x9x5xf32> to vector<1x8x5xf32>
    "tpu.trace_start"() <{level = 10 : i32, message = "bse,bsf->bef"}> : () -> ()
    %cst_48 = arith.constant dense<0.000000e+00> : vector<1x5x5xf32>
    %44 = tpu.matmul %43, %43, %cst_48 {dimension_numbers = #tpu.dot_dimension_numbers<[1], [1], [2], [2], [0, 0, 0, 2, 1, 2], [0], [0]>} : vector<1x8x5xf32>, vector<1x8x5xf32>, vector<1x5x5xf32> -> vector<1x5x5xf32>
    %cst_49 = arith.constant 0.000000e+00 : f32
    "tpu.trace_stop"() : () -> ()
    %45 = vector.broadcast %cst_49 : f32 to vector<1x5x5xf32>
    %c2 = arith.constant 2 : index
    %c0_50 = arith.constant 0 : index
    %c0_51 = arith.constant 0 : index
    %c0_52 = arith.constant 0 : index
    %46 = vector.load %arg3[%c2, %c0_50, %c0_51, %c0_52] : memref<3x2x5x5xf32, #tpu.memory_space<vmem>>, vector<1x1x5x5xf32>
    %47 = vector.shape_cast %46 : vector<1x1x5x5xf32> to vector<5x5xf32>
    %c2_53 = arith.constant 2 : index
    %c0_54 = arith.constant 0 : index
    %c0_55 = arith.constant 0 : index
    %c0_56 = arith.constant 0 : index
    %48 = vector.load %arg2[%c2_53, %c0_54, %c0_55, %c0_56] : memref<3x2x5x5xf32, #tpu.memory_space<vmem>>, vector<1x1x5x5xf32>
    %49 = vector.shape_cast %48 : vector<1x1x5x5xf32> to vector<5x5xf32>
    "tpu.trace_start"() <{level = 10 : i32, message = "bef,fi->bei"}> : () -> ()
    %cst_57 = arith.constant dense<0.000000e+00> : vector<1x5x5xf32>
    %50 = tpu.matmul %44, %47, %cst_57 {dimension_numbers = #tpu.dot_dimension_numbers<[2], [0], [0, 1], [1], [0, 0, 0, 1, 1, 1], [], []>} : vector<1x5x5xf32>, vector<5x5xf32>, vector<1x5x5xf32> -> vector<1x5x5xf32>
    "tpu.trace_stop"() : () -> ()
    "tpu.trace_start"() <{level = 10 : i32, message = "bei,ep->bip"}> : () -> ()
    %cst_58 = arith.constant dense<0.000000e+00> : vector<1x5x5xf32>
    %51 = tpu.matmul %50, %49, %cst_58 {dimension_numbers = #tpu.dot_dimension_numbers<[1], [0], [0, 2], [1], [0, 0, 0, 2, 1, 1], [], []>} : vector<1x5x5xf32>, vector<5x5xf32>, vector<1x5x5xf32> -> vector<1x5x5xf32>
    "tpu.trace_stop"() : () -> ()
    %52 = arith.addf %45, %51 : vector<1x5x5xf32>
    %c2_59 = arith.constant 2 : index
    %c1_60 = arith.constant 1 : index
    %c0_61 = arith.constant 0 : index
    %c0_62 = arith.constant 0 : index
    %53 = vector.load %arg3[%c2_59, %c1_60, %c0_61, %c0_62] : memref<3x2x5x5xf32, #tpu.memory_space<vmem>>, vector<1x1x5x5xf32>
    %54 = vector.shape_cast %53 : vector<1x1x5x5xf32> to vector<5x5xf32>
    %c2_63 = arith.constant 2 : index
    %c1_64 = arith.constant 1 : index
    %c0_65 = arith.constant 0 : index
    %c0_66 = arith.constant 0 : index
    %55 = vector.load %arg2[%c2_63, %c1_64, %c0_65, %c0_66] : memref<3x2x5x5xf32, #tpu.memory_space<vmem>>, vector<1x1x5x5xf32>
    %56 = vector.shape_cast %55 : vector<1x1x5x5xf32> to vector<5x5xf32>
    "tpu.trace_start"() <{level = 10 : i32, message = "bef,fi->bei"}> : () -> ()
    %cst_67 = arith.constant dense<0.000000e+00> : vector<1x5x5xf32>
    %57 = tpu.matmul %44, %54, %cst_67 {dimension_numbers = #tpu.dot_dimension_numbers<[2], [0], [0, 1], [1], [0, 0, 0, 1, 1, 1], [], []>} : vector<1x5x5xf32>, vector<5x5xf32>, vector<1x5x5xf32> -> vector<1x5x5xf32>
    "tpu.trace_stop"() : () -> ()
    "tpu.trace_start"() <{level = 10 : i32, message = "bei,ep->bip"}> : () -> ()
    %cst_68 = arith.constant dense<0.000000e+00> : vector<1x5x5xf32>
    %58 = tpu.matmul %57, %56, %cst_68 {dimension_numbers = #tpu.dot_dimension_numbers<[1], [0], [0, 2], [1], [0, 0, 0, 2, 1, 1], [], []>} : vector<1x5x5xf32>, vector<5x5xf32>, vector<1x5x5xf32> -> vector<1x5x5xf32>
    "tpu.trace_stop"() : () -> ()
    %59 = arith.addf %52, %58 : vector<1x5x5xf32>
    "tpu.trace_start"() <{level = 10 : i32, message = "bnp,bip->bni"}> : () -> ()
    %cst_69 = arith.constant dense<0.000000e+00> : vector<1x9x5xf32>
    %60 = tpu.matmul %42, %59, %cst_69 {dimension_numbers = #tpu.dot_dimension_numbers<[2], [2], [1], [1], [0, 0, 0, 1, 1, 1], [0], [0]>} : vector<1x9x5xf32>, vector<1x5x5xf32>, vector<1x9x5xf32> -> vector<1x9x5xf32>
    "tpu.trace_stop"() : () -> ()
    %cst_70 = arith.constant 1.250000e-01 : f32
    %61 = vector.broadcast %cst_70 : f32 to vector<1x9x5xf32>
    %62 = arith.mulf %60, %61 : vector<1x9x5xf32>
    %63 = arith.addf %42, %62 : vector<1x9x5xf32>
    %c0_71 = arith.constant 0 : index
    %c0_72 = arith.constant 0 : index
    %c0_73 = arith.constant 0 : index
    %64 = vector.load %arg4[%c0_71, %c0_72, %c0_73] : memref<1x9x5xf32, #tpu.memory_space<vmem>>, vector<1x9x5xf32>
    tpu.vector_store %arg4[%c0_71, %c0_72, %c0_73], %63 {strides = array<i32>} : memref<1x9x5xf32, #tpu.memory_space<vmem>>, vector<1x9x5xf32>,
    return
  }
  func.func @transform_0(%arg0: i32) -> (i32, i32, i32) {
    %c0_i32 = arith.constant 0 : i32
    %c0_i32_0 = arith.constant 0 : i32
    %c0_i32_1 = arith.constant 0 : i32
    return %arg0, %c0_i32, %c0_i32_0 : i32, i32, i32
  }
  func.func @transform_1(%arg0: i32) -> (i32, i32, i32, i32) {
    %c0_i32 = arith.constant 0 : i32
    %c0_i32_0 = arith.constant 0 : i32
    %c0_i32_1 = arith.constant 0 : i32
    %c0_i32_2 = arith.constant 0 : i32
    %c0_i32_3 = arith.constant 0 : i32
    return %c0_i32, %c0_i32_0, %c0_i32_1, %c0_i32_2 : i32, i32, i32, i32
  }
  func.func @transform_2(%arg0: i32) -> (i32, i32, i32, i32) {
    %c0_i32 = arith.constant 0 : i32
    %c0_i32_0 = arith.constant 0 : i32
    %c0_i32_1 = arith.constant 0 : i32
    %c0_i32_2 = arith.constant 0 : i32
    %c0_i32_3 = arith.constant 0 : i32
    return %c0_i32, %c0_i32_0, %c0_i32_1, %c0_i32_2 : i32, i32, i32, i32
  }
  func.func @transform_3(%arg0: i32) -> (i32, i32, i32) {
    %c0_i32 = arith.constant 0 : i32
    %c0_i32_0 = arith.constant 0 : i32
    %c0_i32_1 = arith.constant 0 : i32
    return %arg0, %c0_i32, %c0_i32_0 : i32, i32, i32
  }
}

</mosaic_0001>

<llo_original>
// kernel: tpu_custom_call.1
$region0: #{tpu_custom_call.1}
  #allocation0 [shape = 'u32[]', space=smem, size = 0x4, offset = 0x4, fixed_abs, tag = 'smem constant byte address 0x4 - core index']
  #allocation1 [shape = 'u32[144,128]{1,0:T(1,128)}', space=vmem, size = 0x12000, scoped, tag = 'internal scratch']
  %s0 = inlined_call_operand.vmem [shape: f32[2,9,5], index: 0, kind: input, shape index: {}, may-alias: {0,3}]
  %s1 = inlined_call_operand.vmem [shape: f32[3,2,5,5], index: 1, kind: input, shape index: {}]
  %s2 = inlined_call_operand.vmem [shape: f32[3,2,5,5], index: 2, kind: input, shape index: {}]
  %s3 = inlined_call_operand.vmem [shape: f32[2,9,5], index: 3, kind: output, shape index: {}, may-alias: {0,3}]
  %s4 = sld [smem:[#allocation0]]
  $region45: #{tpu_custom_call.1} parent=0
    _
  %s6 = ssub.s32 1, %s4
  %s7 = scalar_select 0, %s6, %s4
  loop: start=0, step=1, limit=4
  $region2: #{tpu_custom_call.1} parent=0 // loop_pre_header
    _
  $region3: #{tpu_custom_call.1} parent=0 // loop_header
    %s9 = sphi 0, %s13
    %p10 = scmp.ge.s32.totalorder %s9, 4
    %s19 = sphi 0, %s21
    %s22 = sphi 0, %s19
    %s23 = sphi 0, %s22
    %s39 = sphi 0, %s23
    %s43 = sphi 0, %s43
    %s45 = sphi 0, %s43
    %s46 = sphi 0, %s45
    %s60 = sphi 0, %s46
    %s64 = sphi 0, %s64
    %s66 = sphi 0, %s64
    %s67 = sphi 0, %s66
    %s81 = sphi 0, %s67
    %s87 = sphi 0, %s89
    %s90 = sphi 0, %s87
    %s91 = sphi 0, %s90
    %s107 = sphi 0, %s91
  $region4: #{tpu_custom_call.1} parent=0 // loop_header_branch
    %12 = sbr.rel (%p10) target = $region8
  $region5: #{tpu_custom_call.1} parent=0 // loop_body
    %s14 = ssub.s32 %s9, 1
    %s15 = ssub.s32 %s9, 2
    %s16 = sadd.s32 %s9, 1
    %s17 = ssub.s32 %s9, %s16
    %p18 = scmp.eq.s32.totalorder %s17, 0
    %s20 = sadd.s32 %s19, 1
    %s21 = scalar_select %p18, %s19, %s20
    %p24 = pneg %p18
    %p25 = scmp.eq.s32.totalorder %s9, 1
    %p26 = por %p24, %p25
    %p27 = scmp.ne.s32.totalorder %s19, %s22
    %p28 = scmp.eq.s32.totalorder %s9, 0
    %p29 = por %p27, %p28
    %p30 = scmp.ne.s32.totalorder %s19, %s22
    %p31 = scmp.eq.s32.totalorder %s14, 1
    %p32 = por %p30, %p31
    %p33 = scmp.ne.s32.totalorder %s22, %s23
    %p34 = scmp.eq.s32.totalorder %s14, 0
    %p35 = por %p33, %p34
    %p36 = scmp.ne.s32.totalorder %s22, %s23
    %p37 = scmp.eq.s32.totalorder %s15, 1
    %p38 = por %p36, %p37
    %p40 = scmp.ne.s32.totalorder %s23, %s39
    %p41 = scmp.eq.s32.totalorder %s15, 0
    %p42 = por %p40, %p41
    %s44 = sadd.s32 %s43, 1
    %p47 = scmp.eq.s32.totalorder %s9, 1
    %p48 = scmp.ne.s32.totalorder %s43, %s45
    %p49 = scmp.eq.s32.totalorder %s9, 0
    %p50 = por %p48, %p49
    %p51 = scmp.ne.s32.totalorder %s43, %s45
    %p52 = scmp.eq.s32.totalorder %s14, 1
    %p53 = por %p51, %p52
    %p54 = scmp.ne.s32.totalorder %s45, %s46
    %p55 = scmp.eq.s32.totalorder %s14, 0
    %p56 = por %p54, %p55
    %p57 = scmp.ne.s32.totalorder %s45, %s46
    %p58 = scmp.eq.s32.totalorder %s15, 1
    %p59 = por %p57, %p58
    %p61 = scmp.ne.s32.totalorder %s46, %s60
    %p62 = scmp.eq.s32.totalorder %s15, 0
    %p63 = por %p61, %p62
    %s65 = sadd.s32 %s64, 1
    %p68 = scmp.eq.s32.totalorder %s9, 1
    %p69 = scmp.ne.s32.totalorder %s64, %s66
    %p70 = scmp.eq.s32.totalorder %s9, 0
    %p71 = por %p69, %p70
    %p72 = scmp.ne.s32.totalorder %s64, %s66
    %p73 = scmp.eq.s32.totalorder %s14, 1
    %p74 = por %p72, %p73
    %p75 = scmp.ne.s32.totalorder %s66, %s67
    %p76 = scmp.eq.s32.totalorder %s14, 0
    %p77 = por %p75, %p76
    %p78 = scmp.ne.s32.totalorder %s66, %s67
    %p79 = scmp.eq.s32.totalorder %s15, 1
    %p80 = por %p78, %p79
    %p82 = scmp.ne.s32.totalorder %s67, %s81
    %p83 = scmp.eq.s32.totalorder %s15, 0
    %p84 = por %p82, %p83
    %s85 = ssub.s32 %s9, %s16
    %p86 = scmp.eq.s32.totalorder %s85, 0
    %s88 = sadd.s32 %s87, 1
    %s89 = scalar_select %p86, %s87, %s88
    %p92 = pneg %p86
    %p93 = scmp.eq.s32.totalorder %s9, 1
    %p94 = por %p92, %p93
    %p95 = scmp.ne.s32.totalorder %s87, %s90
    %p96 = scmp.eq.s32.totalorder %s9, 0
    %p97 = por %p95, %p96
    %p98 = scmp.ne.s32.totalorder %s87, %s90
    %p99 = scmp.eq.s32.totalorder %s14, 1
    %p100 = por %p98, %p99
    %p101 = scmp.ne.s32.totalorder %s90, %s91
    %p102 = scmp.eq.s32.totalorder %s14, 0
    %p103 = por %p101, %p102
    %p104 = scmp.ne.s32.totalorder %s90, %s91
    %p105 = scmp.eq.s32.totalorder %s15, 1
    %p106 = por %p104, %p105
    %p108 = scmp.ne.s32.totalorder %s91, %s107
    %p109 = scmp.eq.s32.totalorder %s15, 0
    %p110 = por %p108, %p109
    %p111 = scmp.le.s32.totalorder 1, %s9
    %p112 = scmp.lt.s32.totalorder %s9, 3
    %p113 = pnand %p111, %p112
    %p114 = pneg %p113
    // Predicated region
    $region9: #{tpu_custom_call.1} parent=5 // pred_check
      _
    $region10: #{tpu_custom_call.1} parent=5 // pred_check_branch
      %116 = sbr.rel (%p113) target = $region12
    $region11: #{tpu_custom_call.1} parent=5 // pred_region
      %s117 = ssub.s32 %s9, 1
      // Predicated region
      $region13: #{tpu_custom_call.1} parent=11 // pred_check
        %p118 = pneg %p56
      $region14: #{tpu_custom_call.1} parent=11 // pred_check_branch
        %120 = sbr.rel (%p118) target = $region16
      $region15: #{tpu_custom_call.1} parent=11 // pred_region
        _
      $region16: #{tpu_custom_call.1} parent=11 // pred_fallthru
        _
      // Predicated region
      $region17: #{tpu_custom_call.1} parent=11 // pred_check
        %p121 = pneg %p77
      $region18: #{tpu_custom_call.1} parent=11 // pred_check_branch
        %123 = sbr.rel (%p121) target = $region20
      $region19: #{tpu_custom_call.1} parent=11 // pred_region
        _
      $region20: #{tpu_custom_call.1} parent=11 // pred_fallthru
        _
    $region12: #{tpu_custom_call.1} parent=5 // pred_fallthru
      _
    %p124 = scmp.lt.s32.totalorder %s9, 2
    // Predicated region
    $region21: #{tpu_custom_call.1} parent=5 // pred_check
      %p125 = pneg %p124
    $region22: #{tpu_custom_call.1} parent=5 // pred_check_branch
      %127 = sbr.rel (%p125) target = $region24
    $region23: #{tpu_custom_call.1} parent=5 // pred_region
      // Predicated region
      $region25: #{tpu_custom_call.1} parent=23 // pred_check
        %p128 = pneg %p29
      $region26: #{tpu_custom_call.1} parent=23 // pred_check_branch
        %130 = sbr.rel (%p128) target = $region28
      $region27: #{tpu_custom_call.1} parent=23 // pred_region
        %p131 = scmp.lt.s32.totalorder %s9, 1
        %s132 = scalar_select %p131, %s9, 1
        %s133 = smul.addr %s132, 2
        %s134 = smul.addr %s133, 8
        %s135 = scalar_lea.vmem %s0, %s134
      $region28: #{tpu_custom_call.1} parent=23 // pred_fallthru
        _
    $region24: #{tpu_custom_call.1} parent=5 // pred_fallthru
      _
    %p136 = scmp.le.s32.totalorder 1, %s9
    %p137 = scmp.lt.s32.totalorder %s9, 3
    %p138 = pnand %p136, %p137
    %p139 = pneg %p138
    // Predicated region
    $region29: #{tpu_custom_call.1} parent=5 // pred_check
      _
    $region30: #{tpu_custom_call.1} parent=5 // pred_check_branch
      %141 = sbr.rel (%p138) target = $region32
    $region31: #{tpu_custom_call.1} parent=5 // pred_region
      %s142 = ssub.s32 %s9, 1
      %p143 = scmp.lt.s32.totalorder %s14, 1
      %s144 = scalar_select %p143, %s14, 1
      %s145 = smul.addr %s144, 2
      %s146 = smul.addr %s145, 8
      %s147 = scalar_lea.vmem %s0, %s146
      %p148 = pneg %p35
      %p149 = pneg %p32
      %p150 = pneg %p56
      %p151 = pneg %p53
      %p152 = pneg %p77
      %p153 = pneg %p74
      %p154 = pneg %p103
      %p155 = pneg %p100
      %p156 = scmp.lt.s32.totalorder %s14, 1
      %s157 = scalar_select %p156, %s14, 1
      %s158 = smul.addr %s157, 2
      %s159 = smul.addr %s158, 8
      %s160 = scalar_lea.vmem %s3, %s159
      %p161 = scmp.lt.s32.totalorder %s14, 1
      %s162 = scalar_select %p161, %s14, 1
      %s163 = smul.addr %s162, 2
      %s164 = smul.addr %s163, 8
      %s165 = scalar_lea.vmem %s0, %s164
      %p166 = scmp.lt.s32.totalorder %s14, 1
      %s167 = scalar_select %p166, %s14, 1
      %s168 = smul.addr %s167, 2
      %s169 = smul.addr %s168, 8
      %s170 = scalar_lea.vmem %s3, %s169
      %v171 = vld [vmem:[%s165] sm:$0xff]
      %v172 = vld [vmem:[%s165 + $0x8] sm:$0x1]
      %173 = vxpose.xlu0.b32.start [1/16] %v171, 128
      %174 = vxpose.xlu0.b32.cont [2/16] 0.0, 128
      %175 = vxpose.xlu0.b32.cont [3/16] 0.0, 128
      %176 = vxpose.xlu0.b32.cont [4/16] 0.0, 128
      %177 = vxpose.xlu0.b32.cont [5/16] 0.0, 128
      %178 = vxpose.xlu0.b32.cont [6/16] 0.0, 128
      %179 = vxpose.xlu0.b32.cont [7/16] 0.0, 128
      %180 = vxpose.xlu0.b32.cont [8/16] 0.0, 128
      %181 = vxpose.xlu0.b32.cont [9/16] 0.0, 128
      %182 = vxpose.xlu0.b32.cont [10/16] 0.0, 128
      %183 = vxpose.xlu0.b32.cont [11/16] 0.0, 128
      %184 = vxpose.xlu0.b32.cont [12/16] 0.0, 128
      %185 = vxpose.xlu0.b32.cont [13/16] 0.0, 128
      %186 = vxpose.xlu0.b32.cont [14/16] 0.0, 128
      %187 = vxpose.xlu0.b32.cont [15/16] 0.0, 128
      %188 = vxpose.xlu0.b32.end [16/16] 0.0, 128
      %v189 = vpop.trf.xlu0
      %v190 = vpop.trf.xlu0
      %v191 = vpop.trf.xlu0
      %v192 = vpop.trf.xlu0
      %v193 = vpop.trf.xlu0
      %v194 = vpop.trf.xlu0
      %v195 = vpop.trf.xlu0
      %v196 = vpop.trf.xlu0
      %v197 = vpop.trf.xlu0
      %v198 = vpop.trf.xlu0
      %v199 = vpop.trf.xlu0
      %v200 = vpop.trf.xlu0
      %v201 = vpop.trf.xlu0
      %v202 = vpop.trf.xlu0
      %v203 = vpop.trf.xlu0
      %v204 = vpop.trf.xlu0
      %vm205 = vcmask 64512
      %v207 = vsel %vm205, %v189, 0
      %209 = vmatprep.subr.mxu0 0.0
      %210 = vmatpush1.msra.mxu0 %v171
      %211 = vmatprep.subr.mxu0 0.0
      %212 = vmatpush1.msra.mxu0 0.0
      %213 = vmatprep.subr.mxu0 0.0
      %214 = vmatpush1.msra.mxu0 0.0
      %215 = vmatprep.subr.mxu0 0.0
      %216 = vmatpush1.msra.mxu0 0.0
      %217 = vmatprep.subr.mxu0 0.0
      %218 = vmatpush1.msra.mxu0 0.0
      %219 = vmatprep.subr.mxu0 0.0
      %220 = vmatpush1.msra.mxu0 0.0
      %221 = vmatprep.subr.mxu0 0.0
      %222 = vmatpush1.msra.mxu0 0.0
      %223 = vmatprep.subr.mxu0 0.0
      %224 = vmatpush1.msra.mxu0 0.0
      %225 = vmatprep.subr.mxu0 0.0
      %226 = vmatpush1.msra.mxu0 0.0
      %227 = vmatprep.subr.mxu0 0.0
      %228 = vmatpush1.msra.mxu0 0.0
      %229 = vmatprep.subr.mxu0 0.0
      %230 = vmatpush1.msra.mxu0 0.0
      %231 = vmatprep.subr.mxu0 0.0
      %232 = vmatpush1.msra.mxu0 0.0
      %233 = vmatprep.subr.mxu0 0.0
      %234 = vmatpush1.msra.mxu0 0.0
      %235 = vmatprep.subr.mxu0 0.0
      %236 = vmatpush1.msra.mxu0 0.0
      %237 = vmatprep.subr.mxu0 0.0
      %238 = vmatpush1.msra.mxu0 0.0
      %239 = vmatprep.subr.mxu0 0.0
      %240 = vmatpush1.msra.mxu0 0.0
      %241 = vmatprep.subr.mxu0 0.0
      %242 = vmatpush1.msra.mxu0 0.0
      %243 = vmatprep.subr.mxu0 0.0
      %244 = vmatpush1.msra.mxu0 0.0
      %245 = vmatprep.subr.mxu0 0.0
      %246 = vmatpush1.msra.mxu0 0.0
      %247 = vmatprep.subr.mxu0 0.0
      %248 = vmatpush1.msra.mxu0 0.0
      %249 = vmatprep.subr.mxu0 0.0
      %250 = vmatpush1.msra.mxu0 0.0
      %251 = vmatprep.subr.mxu0 0.0
      %252 = vmatpush1.msra.mxu0 0.0
      %253 = vmatprep.subr.mxu0 0.0
      %254 = vmatpush1.msra.mxu0 0.0
      %255 = vmatprep.subr.mxu0 0.0
      %256 = vmatpush1.msra.mxu0 0.0
      %257 = vmatprep.subr.mxu0 0.0
      %258 = vmatpush1.msra.mxu0 0.0
      %259 = vmatprep.subr.mxu0 0.0
      %260 = vmatpush1.msra.mxu0 0.0
      %261 = vmatprep.subr.mxu0 0.0
      %262 = vmatpush1.msra.mxu0 0.0
      %263 = vmatprep.subr.mxu0 0.0
      %264 = vmatpush1.msra.mxu0 0.0
      %265 = vmatprep.subr.mxu0 0.0
      %266 = vmatpush1.msra.mxu0 0.0
      %267 = vmatprep.subr.mxu0 0.0
      %268 = vmatpush1.msra.mxu0 0.0
      %269 = vmatprep.subr.mxu0 0.0
      %270 = vmatpush1.msra.mxu0 0.0
      %271 = vmatprep.subr.mxu0 0.0
      %272 = vmatpush1.msra.mxu0 0.0
      %273 = vmatprep.mubr.f32.mxu0 0.0
      %274 = vmatmul.mubr.f32.gmra.mrb[0].mxu0 %v207
      %v275 = vpop.f32.mrb[0].mxu0
      %v276 = vadd.f32 0.0, %v275
      %v277 = vpop.f32.mrb[0].mxu0
      %278 = vdwg.mxu0
      %v279 = vld [vmem:[%s2] sm:$0x1f]
      %v280 = vld [vmem:[%s1] sm:$0x1f]
      %vm281 = vcmask 39936
      %v283 = vsel %vm281, %v276, 0
      %vm285 = vcmask 1044480
      %v287 = vsel %vm285, %v279, 0
      %289 = vmatprep.subr.mxu0 0.0
      %290 = vmatpush1.msra.mxu0 %v287
      %291 = vmatprep.subr.mxu0 0.0
      %292 = vmatpush1.msra.mxu0 0.0
      %293 = vmatprep.subr.mxu0 0.0
      %294 = vmatpush1.msra.mxu0 0.0
      %295 = vmatprep.subr.mxu0 0.0
      %296 = vmatpush1.msra.mxu0 0.0
      %297 = vmatprep.subr.mxu0 0.0
      %298 = vmatpush1.msra.mxu0 0.0
      %299 = vmatprep.subr.mxu0 0.0
      %300 = vmatpush1.msra.mxu0 0.0
      %301 = vmatprep.subr.mxu0 0.0
      %302 = vmatpush1.msra.mxu0 0.0
      %303 = vmatprep.subr.mxu0 0.0
      %304 = vmatpush1.msra.mxu0 0.0
      %305 = vmatprep.subr.mxu0 0.0
      %306 = vmatpush1.msra.mxu0 0.0
      %307 = vmatprep.subr.mxu0 0.0
      %308 = vmatpush1.msra.mxu0 0.0
      %309 = vmatprep.subr.mxu0 0.0
      %310 = vmatpush1.msra.mxu0 0.0
      %311 = vmatprep.subr.mxu0 0.0
      %312 = vmatpush1.msra.mxu0 0.0
      %313 = vmatprep.subr.mxu0 0.0
      %314 = vmatpush1.msra.mxu0 0.0
      %315 = vmatprep.subr.mxu0 0.0
      %316 = vmatpush1.msra.mxu0 0.0
      %317 = vmatprep.subr.mxu0 0.0
      %318 = vmatpush1.msra.mxu0 0.0
      %319 = vmatprep.subr.mxu0 0.0
      %320 = vmatpush1.msra.mxu0 0.0
      %321 = vmatprep.subr.mxu0 0.0
      %322 = vmatpush1.msra.mxu0 0.0
      %323 = vmatprep.subr.mxu0 0.0
      %324 = vmatpush1.msra.mxu0 0.0
      %325 = vmatprep.subr.mxu0 0.0
      %326 = vmatpush1.msra.mxu0 0.0
      %327 = vmatprep.subr.mxu0 0.0
      %328 = vmatpush1.msra.mxu0 0.0
      %329 = vmatprep.subr.mxu0 0.0
      %330 = vmatpush1.msra.mxu0 0.0
      %331 = vmatprep.subr.mxu0 0.0
      %332 = vmatpush1.msra.mxu0 0.0
      %333 = vmatprep.subr.mxu0 0.0
      %334 = vmatpush1.msra.mxu0 0.0
      %335 = vmatprep.subr.mxu0 0.0
      %336 = vmatpush1.msra.mxu0 0.0
      %337 = vmatprep.subr.mxu0 0.0
      %338 = vmatpush1.msra.mxu0 0.0
      %339 = vmatprep.subr.mxu0 0.0
      %340 = vmatpush1.msra.mxu0 0.0
      %341 = vmatprep.subr.mxu0 0.0
      %342 = vmatpush1.msra.mxu0 0.0
      %343 = vmatprep.subr.mxu0 0.0
      %344 = vmatpush1.msra.mxu0 0.0
      %345 = vmatprep.subr.mxu0 0.0
      %346 = vmatpush1.msra.mxu0 0.0
      %347 = vmatprep.subr.mxu0 0.0
      %348 = vmatpush1.msra.mxu0 0.0
      %349 = vmatprep.subr.mxu0 0.0
      %350 = vmatpush1.msra.mxu0 0.0
      %351 = vmatprep.subr.mxu0 0.0
      %352 = vmatpush1.msra.mxu0 0.0
      %353 = vmatprep.mubr.f32.mxu0 0.0
      %354 = vmatmul.mubr.f32.gmra.mrb[0].mxu0 %v283
      %v355 = vpop.f32.mrb[0].mxu0
      %v356 = vadd.f32 0.0, %v355
      %v357 = vpop.f32.mrb[0].mxu0
      %358 = vdwg.mxu0
      %s359 = scalar_lea.vmem %s2, 8
      %v360 = vld [vmem:[%s359] sm:$0x1f]
      %s361 = scalar_lea.vmem %s1, 8
      %v362 = vld [vmem:[%s361] sm:$0x1f]
      %v364 = vsel %vm285, %v360, 0
      %366 = vmatprep.subr.mxu0 0.0
      %367 = vmatpush1.msra.mxu0 %v364
      %368 = vmatprep.subr.mxu0 0.0
      %369 = vmatpush1.msra.mxu0 0.0
      %370 = vmatprep.subr.mxu0 0.0
      %371 = vmatpush1.msra.mxu0 0.0
      %372 = vmatprep.subr.mxu0 0.0
      %373 = vmatpush1.msra.mxu0 0.0
      %374 = vmatprep.subr.mxu0 0.0
      %375 = vmatpush1.msra.mxu0 0.0
      %376 = vmatprep.subr.mxu0 0.0
      %377 = vmatpush1.msra.mxu0 0.0
      %378 = vmatprep.subr.mxu0 0.0
      %379 = vmatpush1.msra.mxu0 0.0
      %380 = vmatprep.subr.mxu0 0.0
      %381 = vmatpush1.msra.mxu0 0.0
      %382 = vmatprep.subr.mxu0 0.0
      %383 = vmatpush1.msra.mxu0 0.0
      %384 = vmatprep.subr.mxu0 0.0
      %385 = vmatpush1.msra.mxu0 0.0
      %386 = vmatprep.subr.mxu0 0.0
      %387 = vmatpush1.msra.mxu0 0.0
      %388 = vmatprep.subr.mxu0 0.0
      %389 = vmatpush1.msra.mxu0 0.0
      %390 = vmatprep.subr.mxu0 0.0
      %391 = vmatpush1.msra.mxu0 0.0
      %392 = vmatprep.subr.mxu0 0.0
      %393 = vmatpush1.msra.mxu0 0.0
      %394 = vmatprep.subr.mxu0 0.0
      %395 = vmatpush1.msra.mxu0 0.0
      %396 = vmatprep.subr.mxu0 0.0
      %397 = vmatpush1.msra.mxu0 0.0
      %398 = vmatprep.subr.mxu0 0.0
      %399 = vmatpush1.msra.mxu0 0.0
      %400 = vmatprep.subr.mxu0 0.0
      %401 = vmatpush1.msra.mxu0 0.0
      %402 = vmatprep.subr.mxu0 0.0
      %403 = vmatpush1.msra.mxu0 0.0
      %404 = vmatprep.subr.mxu0 0.0
      %405 = vmatpush1.msra.mxu0 0.0
      %406 = vmatprep.subr.mxu0 0.0
      %407 = vmatpush1.msra.mxu0 0.0
      %408 = vmatprep.subr.mxu0 0.0
      %409 = vmatpush1.msra.mxu0 0.0
      %410 = vmatprep.subr.mxu0 0.0
      %411 = vmatpush1.msra.mxu0 0.0
      %412 = vmatprep.subr.mxu0 0.0
      %413 = vmatpush1.msra.mxu0 0.0
      %414 = vmatprep.subr.mxu0 0.0
      %415 = vmatpush1.msra.mxu0 0.0
      %416 = vmatprep.subr.mxu0 0.0
      %417 = vmatpush1.msra.mxu0 0.0
      %418 = vmatprep.subr.mxu0 0.0
      %419 = vmatpush1.msra.mxu0 0.0
      %420 = vmatprep.subr.mxu0 0.0
      %421 = vmatpush1.msra.mxu0 0.0
      %422 = vmatprep.subr.mxu0 0.0
      %423 = vmatpush1.msra.mxu0 0.0
      %424 = vmatprep.subr.mxu0 0.0
      %425 = vmatpush1.msra.mxu0 0.0
      %426 = vmatprep.subr.mxu0 0.0
      %427 = vmatpush1.msra.mxu0 0.0
      %428 = vmatprep.subr.mxu0 0.0
      %429 = vmatpush1.msra.mxu0 0.0
      %430 = vmatprep.mubr.f32.mxu0 0.0
      %431 = vmatmul.mubr.f32.gmra.mrb[0].mxu0 %v283
      %v432 = vpop.f32.mrb[0].mxu0
      %v433 = vadd.f32 0.0, %v432
      %v434 = vpop.f32.mrb[0].mxu0
      %435 = vdwg.mxu0
      %436 = vxpose.xlu0.b32.start [1/16] %v433, 128
      %437 = vxpose.xlu0.b32.cont [2/16] 0.0, 128
      %438 = vxpose.xlu0.b32.cont [3/16] 0.0, 128
      %439 = vxpose.xlu0.b32.cont [4/16] 0.0, 128
      %440 = vxpose.xlu0.b32.cont [5/16] 0.0, 128
      %441 = vxpose.xlu0.b32.cont [6/16] 0.0, 128
      %442 = vxpose.xlu0.b32.cont [7/16] 0.0, 128
      %443 = vxpose.xlu0.b32.cont [8/16] 0.0, 128
      %444 = vxpose.xlu0.b32.cont [9/16] 0.0, 128
      %445 = vxpose.xlu0.b32.cont [10/16] 0.0, 128
      %446 = vxpose.xlu0.b32.cont [11/16] 0.0, 128
      %447 = vxpose.xlu0.b32.cont [12/16] 0.0, 128
      %448 = vxpose.xlu0.b32.cont [13/16] 0.0, 128
      %449 = vxpose.xlu0.b32.cont [14/16] 0.0, 128
      %450 = vxpose.xlu0.b32.cont [15/16] 0.0, 128
      %451 = vxpose.xlu0.b32.end [16/16] 0.0, 128
      %v452 = vpop.trf.xlu0
      %v453 = vpop.trf.xlu0
      %v454 = vpop.trf.xlu0
      %v455 = vpop.trf.xlu0
      %v456 = vpop.trf.xlu0
      %v457 = vpop.trf.xlu0
      %v458 = vpop.trf.xlu0
      %v459 = vpop.trf.xlu0
      %v460 = vpop.trf.xlu0
      %v461 = vpop.trf.xlu0
      %v462 = vpop.trf.xlu0
      %v463 = vpop.trf.xlu0
      %v464 = vpop.trf.xlu0
      %v465 = vpop.trf.xlu0
      %v466 = vpop.trf.xlu0
      %v467 = vpop.trf.xlu0
      %v469 = vsel %vm281, %v452, 0
      %v472 = vsel %vm285, %v362, 0
      %474 = vmatprep.subr.mxu0 0.0
      %475 = vmatpush1.msra.mxu0 %v472
      %476 = vmatprep.subr.mxu0 0.0
      %477 = vmatpush1.msra.mxu0 0.0
      %478 = vmatprep.subr.mxu0 0.0
      %479 = vmatpush1.msra.mxu0 0.0
      %480 = vmatprep.subr.mxu0 0.0
      %481 = vmatpush1.msra.mxu0 0.0
      %482 = vmatprep.subr.mxu0 0.0
      %483 = vmatpush1.msra.mxu0 0.0
      %484 = vmatprep.subr.mxu0 0.0
      %485 = vmatpush1.msra.mxu0 0.0
      %486 = vmatprep.subr.mxu0 0.0
      %487 = vmatpush1.msra.mxu0 0.0
      %488 = vmatprep.subr.mxu0 0.0
      %489 = vmatpush1.msra.mxu0 0.0
      %490 = vmatprep.subr.mxu0 0.0
      %491 = vmatpush1.msra.mxu0 0.0
      %492 = vmatprep.subr.mxu0 0.0
      %493 = vmatpush1.msra.mxu0 0.0
      %494 = vmatprep.subr.mxu0 0.0
      %495 = vmatpush1.msra.mxu0 0.0
      %496 = vmatprep.subr.mxu0 0.0
      %497 = vmatpush1.msra.mxu0 0.0
      %498 = vmatprep.subr.mxu0 0.0
      %499 = vmatpush1.msra.mxu0 0.0
      %500 = vmatprep.subr.mxu0 0.0
      %501 = vmatpush1.msra.mxu0 0.0
      %502 = vmatprep.subr.mxu0 0.0
      %503 = vmatpush1.msra.mxu0 0.0
      %504 = vmatprep.subr.mxu0 0.0
      %505 = vmatpush1.msra.mxu0 0.0
      %506 = vmatprep.subr.mxu0 0.0
      %507 = vmatpush1.msra.mxu0 0.0
      %508 = vmatprep.subr.mxu0 0.0
      %509 = vmatpush1.msra.mxu0 0.0
      %510 = vmatprep.subr.mxu0 0.0
      %511 = vmatpush1.msra.mxu0 0.0
      %512 = vmatprep.subr.mxu0 0.0
      %513 = vmatpush1.msra.mxu0 0.0
      %514 = vmatprep.subr.mxu0 0.0
      %515 = vmatpush1.msra.mxu0 0.0
      %516 = vmatprep.subr.mxu0 0.0
      %517 = vmatpush1.msra.mxu0 0.0
      %518 = vmatprep.subr.mxu0 0.0
      %519 = vmatpush1.msra.mxu0 0.0
      %520 = vmatprep.subr.mxu0 0.0
      %521 = vmatpush1.msra.mxu0 0.0
      %522 = vmatprep.subr.mxu0 0.0
      %523 = vmatpush1.msra.mxu0 0.0
      %524 = vmatprep.subr.mxu0 0.0
      %525 = vmatpush1.msra.mxu0 0.0
      %526 = vmatprep.subr.mxu0 0.0
      %527 = vmatpush1.msra.mxu0 0.0
      %528 = vmatprep.subr.mxu0 0.0
      %529 = vmatpush1.msra.mxu0 0.0
      %530 = vmatprep.subr.mxu0 0.0
      %531 = vmatpush1.msra.mxu0 0.0
      %532 = vmatprep.subr.mxu0 0.0
      %533 = vmatpush1.msra.mxu0 0.0
      %534 = vmatprep.subr.mxu0 0.0
      %535 = vmatpush1.msra.mxu0 0.0
      %536 = vmatprep.subr.mxu0 0.0
      %537 = vmatpush1.msra.mxu0 0.0
      %538 = vmatprep.mubr.f32.mxu0 0.0
      %539 = vmatmul.mubr.f32.gmra.mrb[0].mxu0 %v469
      %v540 = vpop.f32.mrb[0].mxu0
      %v541 = vadd.f32 0.0, %v540
      %v542 = vpop.f32.mrb[0].mxu0
      %543 = vdwg.mxu0
      %544 = vxpose.xlu0.b32.start [1/16] %v356, 128
      %545 = vxpose.xlu0.b32.cont [2/16] 0.0, 128
      %546 = vxpose.xlu0.b32.cont [3/16] 0.0, 128
      %547 = vxpose.xlu0.b32.cont [4/16] 0.0, 128
      %548 = vxpose.xlu0.b32.cont [5/16] 0.0, 128
      %549 = vxpose.xlu0.b32.cont [6/16] 0.0, 128
      %550 = vxpose.xlu0.b32.cont [7/16] 0.0, 128
      %551 = vxpose.xlu0.b32.cont [8/16] 0.0, 128
      %552 = vxpose.xlu0.b32.cont [9/16] 0.0, 128
      %553 = vxpose.xlu0.b32.cont [10/16] 0.0, 128
      %554 = vxpose.xlu0.b32.cont [11/16] 0.0, 128
      %555 = vxpose.xlu0.b32.cont [12/16] 0.0, 128
      %556 = vxpose.xlu0.b32.cont [13/16] 0.0, 128
      %557 = vxpose.xlu0.b32.cont [14/16] 0.0, 128
      %558 = vxpose.xlu0.b32.cont [15/16] 0.0, 128
      %559 = vxpose.xlu0.b32.end [16/16] 0.0, 128
      %v560 = vpop.trf.xlu0
      %v561 = vpop.trf.xlu0
      %v562 = vpop.trf.xlu0
      %v563 = vpop.trf.xlu0
      %v564 = vpop.trf.xlu0
      %v565 = vpop.trf.xlu0
      %v566 = vpop.trf.xlu0
      %v567 = vpop.trf.xlu0
      %v568 = vpop.trf.xlu0
      %v569 = vpop.trf.xlu0
      %v570 = vpop.trf.xlu0
      %v571 = vpop.trf.xlu0
      %v572 = vpop.trf.xlu0
      %v573 = vpop.trf.xlu0
      %v574 = vpop.trf.xlu0
      %v575 = vpop.trf.xlu0
      %v577 = vsel %vm281, %v560, 0
      %v580 = vsel %vm285, %v280, 0
      %582 = vmatprep.subr.mxu0 0.0
      %583 = vmatpush1.msra.mxu0 %v580
      %584 = vmatprep.subr.mxu0 0.0
      %585 = vmatpush1.msra.mxu0 0.0
      %586 = vmatprep.subr.mxu0 0.0
      %587 = vmatpush1.msra.mxu0 0.0
      %588 = vmatprep.subr.mxu0 0.0
      %589 = vmatpush1.msra.mxu0 0.0
      %590 = vmatprep.subr.mxu0 0.0
      %591 = vmatpush1.msra.mxu0 0.0
      %592 = vmatprep.subr.mxu0 0.0
      %593 = vmatpush1.msra.mxu0 0.0
      %594 = vmatprep.subr.mxu0 0.0
      %595 = vmatpush1.msra.mxu0 0.0
      %596 = vmatprep.subr.mxu0 0.0
      %597 = vmatpush1.msra.mxu0 0.0
      %598 = vmatprep.subr.mxu0 0.0
      %599 = vmatpush1.msra.mxu0 0.0
      %600 = vmatprep.subr.mxu0 0.0
      %601 = vmatpush1.msra.mxu0 0.0
      %602 = vmatprep.subr.mxu0 0.0
      %603 = vmatpush1.msra.mxu0 0.0
      %604 = vmatprep.subr.mxu0 0.0
      %605 = vmatpush1.msra.mxu0 0.0
      %606 = vmatprep.subr.mxu0 0.0
      %607 = vmatpush1.msra.mxu0 0.0
      %608 = vmatprep.subr.mxu0 0.0
      %609 = vmatpush1.msra.mxu0 0.0
      %610 = vmatprep.subr.mxu0 0.0
      %611 = vmatpush1.msra.mxu0 0.0
      %612 = vmatprep.subr.mxu0 0.0
      %613 = vmatpush1.msra.mxu0 0.0
      %614 = vmatprep.subr.mxu0 0.0
      %615 = vmatpush1.msra.mxu0 0.0
      %616 = vmatprep.subr.mxu0 0.0
      %617 = vmatpush1.msra.mxu0 0.0
      %618 = vmatprep.subr.mxu0 0.0
      %619 = vmatpush1.msra.mxu0 0.0
      %620 = vmatprep.subr.mxu0 0.0
      %621 = vmatpush1.msra.mxu0 0.0
      %622 = vmatprep.subr.mxu0 0.0
      %623 = vmatpush1.msra.mxu0 0.0
      %624 = vmatprep.subr.mxu0 0.0
      %625 = vmatpush1.msra.mxu0 0.0
      %626 = vmatprep.subr.mxu0 0.0
      %627 = vmatpush1.msra.mxu0 0.0
      %628 = vmatprep.subr.mxu0 0.0
      %629 = vmatpush1.msra.mxu0 0.0
      %630 = vmatprep.subr.mxu0 0.0
      %631 = vmatpush1.msra.mxu0 0.0
      %632 = vmatprep.subr.mxu0 0.0
      %633 = vmatpush1.msra.mxu0 0.0
      %634 = vmatprep.subr.mxu0 0.0
      %635 = vmatpush1.msra.mxu0 0.0
      %636 = vmatprep.subr.mxu0 0.0
      %637 = vmatpush1.msra.mxu0 0.0
      %638 = vmatprep.subr.mxu0 0.0
      %639 = vmatpush1.msra.mxu0 0.0
      %640 = vmatprep.subr.mxu0 0.0
      %641 = vmatpush1.msra.mxu0 0.0
      %642 = vmatprep.subr.mxu0 0.0
      %643 = vmatpush1.msra.mxu0 0.0
      %644 = vmatprep.subr.mxu0 0.0
      %645 = vmatpush1.msra.mxu0 0.0
      %646 = vmatprep.mubr.f32.mxu0 0.0
      %647 = vmatmul.mubr.f32.gmra.mrb[0].mxu0 %v577
      %v648 = vpop.f32.mrb[0].mxu0
      %v649 = vadd.f32 %v541, %v648
      %v650 = vpop.f32.mrb[0].mxu0
      %651 = vdwg.mxu0
      %v653 = vsel %vm281, %v171, 0
      %v656 = vsel %vm281, %v172, 0
      %v659 = vsel %vm281, %v649, 0
      %661 = vmatprep.subr.mxu0 0.0
      %662 = vmatpush1.xpose.msra.mxu0 %v659
      %663 = vmatprep.subr.mxu0 0.0
      %664 = vmatpush1.xpose.msra.mxu0 0.0
      %665 = vmatprep.subr.mxu0 0.0
      %666 = vmatpush1.xpose.msra.mxu0 0.0
      %667 = vmatprep.subr.mxu0 0.0
      %668 = vmatpush1.xpose.msra.mxu0 0.0
      %669 = vmatprep.subr.mxu0 0.0
      %670 = vmatpush1.xpose.msra.mxu0 0.0
      %671 = vmatprep.subr.mxu0 0.0
      %672 = vmatpush1.xpose.msra.mxu0 0.0
      %673 = vmatprep.subr.mxu0 0.0
      %674 = vmatpush1.xpose.msra.mxu0 0.0
      %675 = vmatprep.subr.mxu0 0.0
      %676 = vmatpush1.xpose.msra.mxu0 0.0
      %677 = vmatprep.subr.mxu0 0.0
      %678 = vmatpush1.xpose.msra.mxu0 0.0
      %679 = vmatprep.subr.mxu0 0.0
      %680 = vmatpush1.xpose.msra.mxu0 0.0
      %681 = vmatprep.subr.mxu0 0.0
      %682 = vmatpush1.xpose.msra.mxu0 0.0
      %683 = vmatprep.subr.mxu0 0.0
      %684 = vmatpush1.xpose.msra.mxu0 0.0
      %685 = vmatprep.subr.mxu0 0.0
      %686 = vmatpush1.xpose.msra.mxu0 0.0
      %687 = vmatprep.subr.mxu0 0.0
      %688 = vmatpush1.xpose.msra.mxu0 0.0
      %689 = vmatprep.subr.mxu0 0.0
      %690 = vmatpush1.xpose.msra.mxu0 0.0
      %691 = vmatprep.subr.mxu0 0.0
      %692 = vmatpush1.xpose.msra.mxu0 0.0
      %693 = vmatprep.subr.mxu0 0.0
      %694 = vmatpush1.xpose.msra.mxu0 0.0
      %695 = vmatprep.subr.mxu0 0.0
      %696 = vmatpush1.xpose.msra.mxu0 0.0
      %697 = vmatprep.subr.mxu0 0.0
      %698 = vmatpush1.xpose.msra.mxu0 0.0
      %699 = vmatprep.subr.mxu0 0.0
      %700 = vmatpush1.xpose.msra.mxu0 0.0
      %701 = vmatprep.subr.mxu0 0.0
      %702 = vmatpush1.xpose.msra.mxu0 0.0
      %703 = vmatprep.subr.mxu0 0.0
      %704 = vmatpush1.xpose.msra.mxu0 0.0
      %705 = vmatprep.subr.mxu0 0.0
      %706 = vmatpush1.xpose.msra.mxu0 0.0
      %707 = vmatprep.subr.mxu0 0.0
      %708 = vmatpush1.xpose.msra.mxu0 0.0
      %709 = vmatprep.subr.mxu0 0.0
      %710 = vmatpush1.xpose.msra.mxu0 0.0
      %711 = vmatprep.subr.mxu0 0.0
      %712 = vmatpush1.xpose.msra.mxu0 0.0
      %713 = vmatprep.subr.mxu0 0.0
      %714 = vmatpush1.xpose.msra.mxu0 0.0
      %715 = vmatprep.subr.mxu0 0.0
      %716 = vmatpush1.xpose.msra.mxu0 0.0
      %717 = vmatprep.subr.mxu0 0.0
      %718 = vmatpush1.xpose.msra.mxu0 0.0
      %719 = vmatprep.subr.mxu0 0.0
      %720 = vmatpush1.xpose.msra.mxu0 0.0
      %721 = vmatprep.subr.mxu0 0.0
      %722 = vmatpush1.xpose.msra.mxu0 0.0
      %723 = vmatprep.subr.mxu0 0.0
      %724 = vmatpush1.xpose.msra.mxu0 0.0
      %725 = vmatprep.mubr.f32.mxu0 0.0
      %726 = vmatmul.mubr.f32.gmra.mrb[0].mxu0 %v653
      %v727 = vpop.f32.mrb[0].mxu0
      %v728 = vadd.f32 0.0, %v727
      %v729 = vpop.f32.mrb[0].mxu0
      %730 = vmatprep.mubr.f32.mxu0 0.0
      %731 = vmatmul.mubr.f32.gmra.mrb[0].mxu0 %v656
      %v732 = vpop.f32.mrb[0].mxu0
      %v733 = vadd.f32 0.0, %v732
      %v734 = vpop.f32.mrb[0].mxu0
      %735 = vdwg.mxu0
      %v736 = vmul.f32 %v728, 0.125
      %v737 = vmul.f32 %v733, 0.125
      %v738 = vadd.f32 %v171, %v736
      %v739 = vadd.f32 %v172, %v737
      %740 = vxpose.xlu0.b32.start [1/16] %v738, 128
      %741 = vxpose.xlu0.b32.cont [2/16] 0.0, 128
      %742 = vxpose.xlu0.b32.cont [3/16] 0.0, 128
      %743 = vxpose.xlu0.b32.cont [4/16] 0.0, 128
      %744 = vxpose.xlu0.b32.cont [5/16] 0.0, 128
      %745 = vxpose.xlu0.b32.cont [6/16] 0.0, 128
      %746 = vxpose.xlu0.b32.cont [7/16] 0.0, 128
      %747 = vxpose.xlu0.b32.cont [8/16] 0.0, 128
      %748 = vxpose.xlu0.b32.cont [9/16] 0.0, 128
      %749 = vxpose.xlu0.b32.cont [10/16] 0.0, 128
      %750 = vxpose.xlu0.b32.cont [11/16] 0.0, 128
      %751 = vxpose.xlu0.b32.cont [12/16] 0.0, 128
      %752 = vxpose.xlu0.b32.cont [13/16] 0.0, 128
      %753 = vxpose.xlu0.b32.cont [14/16] 0.0, 128
      %754 = vxpose.xlu0.b32.cont [15/16] 0.0, 128
      %755 = vxpose.xlu0.b32.end [16/16] 0.0, 128
      %v756 = vpop.trf.xlu0
      %v757 = vpop.trf.xlu0
      %v758 = vpop.trf.xlu0
      %v759 = vpop.trf.xlu0
      %v760 = vpop.trf.xlu0
      %v761 = vpop.trf.xlu0
      %v762 = vpop.trf.xlu0
      %v763 = vpop.trf.xlu0
      %v764 = vpop.trf.xlu0
      %v765 = vpop.trf.xlu0
      %v766 = vpop.trf.xlu0
      %v767 = vpop.trf.xlu0
      %v768 = vpop.trf.xlu0
      %v769 = vpop.trf.xlu0
      %v770 = vpop.trf.xlu0
      %v771 = vpop.trf.xlu0
      %v773 = vsel %vm205, %v756, 0
      %775 = vmatprep.subr.mxu0 0.0
      %776 = vmatpush1.msra.mxu0 %v738
      %777 = vmatprep.subr.mxu0 0.0
      %778 = vmatpush1.msra.mxu0 0.0
      %779 = vmatprep.subr.mxu0 0.0
      %780 = vmatpush1.msra.mxu0 0.0
      %781 = vmatprep.subr.mxu0 0.0
      %782 = vmatpush1.msra.mxu0 0.0
      %783 = vmatprep.subr.mxu0 0.0
      %784 = vmatpush1.msra.mxu0 0.0
      %785 = vmatprep.subr.mxu0 0.0
      %786 = vmatpush1.msra.mxu0 0.0
      %787 = vmatprep.subr.mxu0 0.0
      %788 = vmatpush1.msra.mxu0 0.0
      %789 = vmatprep.subr.mxu0 0.0
      %790 = vmatpush1.msra.mxu0 0.0
      %791 = vmatprep.subr.mxu0 0.0
      %792 = vmatpush1.msra.mxu0 0.0
      %793 = vmatprep.subr.mxu0 0.0
      %794 = vmatpush1.msra.mxu0 0.0
      %795 = vmatprep.subr.mxu0 0.0
      %796 = vmatpush1.msra.mxu0 0.0
      %797 = vmatprep.subr.mxu0 0.0
      %798 = vmatpush1.msra.mxu0 0.0
      %799 = vmatprep.subr.mxu0 0.0
      %800 = vmatpush1.msra.mxu0 0.0
      %801 = vmatprep.subr.mxu0 0.0
      %802 = vmatpush1.msra.mxu0 0.0
      %803 = vmatprep.subr.mxu0 0.0
      %804 = vmatpush1.msra.mxu0 0.0
      %805 = vmatprep.subr.mxu0 0.0
      %806 = vmatpush1.msra.mxu0 0.0
      %807 = vmatprep.subr.mxu0 0.0
      %808 = vmatpush1.msra.mxu0 0.0
      %809 = vmatprep.subr.mxu0 0.0
      %810 = vmatpush1.msra.mxu0 0.0
      %811 = vmatprep.subr.mxu0 0.0
      %812 = vmatpush1.msra.mxu0 0.0
      %813 = vmatprep.subr.mxu0 0.0
      %814 = vmatpush1.msra.mxu0 0.0
      %815 = vmatprep.subr.mxu0 0.0
      %816 = vmatpush1.msra.mxu0 0.0
      %817 = vmatprep.subr.mxu0 0.0
      %818 = vmatpush1.msra.mxu0 0.0
      %819 = vmatprep.subr.mxu0 0.0
      %820 = vmatpush1.msra.mxu0 0.0
      %821 = vmatprep.subr.mxu0 0.0
      %822 = vmatpush1.msra.mxu0 0.0
      %823 = vmatprep.subr.mxu0 0.0
      %824 = vmatpush1.msra.mxu0 0.0
      %825 = vmatprep.subr.mxu0 0.0
      %826 = vmatpush1.msra.mxu0 0.0
      %827 = vmatprep.subr.mxu0 0.0
      %828 = vmatpush1.msra.mxu0 0.0
      %829 = vmatprep.subr.mxu0 0.0
      %830 = vmatpush1.msra.mxu0 0.0
      %831 = vmatprep.subr.mxu0 0.0
      %832 = vmatpush1.msra.mxu0 0.0
      %833 = vmatprep.subr.mxu0 0.0
      %834 = vmatpush1.msra.mxu0 0.0
      %835 = vmatprep.subr.mxu0 0.0
      %836 = vmatpush1.msra.mxu0 0.0
      %837 = vmatprep.subr.mxu0 0.0
      %838 = vmatpush1.msra.mxu0 0.0
      %839 = vmatprep.mubr.f32.mxu0 0.0
      %840 = vmatmul.mubr.f32.gmra.mrb[0].mxu0 %v773
      %v841 = vpop.f32.mrb[0].mxu0
      %v842 = vadd.f32 0.0, %v841
      %v843 = vpop.f32.mrb[0].mxu0
      %844 = vdwg.mxu0
      %s845 = scalar_lea.vmem %s2, 16
      %v846 = vld [vmem:[%s845] sm:$0x1f]
      %s847 = scalar_lea.vmem %s1, 16
      %v848 = vld [vmem:[%s847] sm:$0x1f]
      %v850 = vsel %vm281, %v842, 0
      %v853 = vsel %vm285, %v846, 0
      %855 = vmatprep.subr.mxu0 0.0
      %856 = vmatpush1.msra.mxu0 %v853
      %857 = vmatprep.subr.mxu0 0.0
      %858 = vmatpush1.msra.mxu0 0.0
      %859 = vmatprep.subr.mxu0 0.0
      %860 = vmatpush1.msra.mxu0 0.0
      %861 = vmatprep.subr.mxu0 0.0
      %862 = vmatpush1.msra.mxu0 0.0
      %863 = vmatprep.subr.mxu0 0.0
      %864 = vmatpush1.msra.mxu0 0.0
      %865 = vmatprep.subr.mxu0 0.0
      %866 = vmatpush1.msra.mxu0 0.0
      %867 = vmatprep.subr.mxu0 0.0
      %868 = vmatpush1.msra.mxu0 0.0
      %869 = vmatprep.subr.mxu0 0.0
      %870 = vmatpush1.msra.mxu0 0.0
      %871 = vmatprep.subr.mxu0 0.0
      %872 = vmatpush1.msra.mxu0 0.0
      %873 = vmatprep.subr.mxu0 0.0
      %874 = vmatpush1.msra.mxu0 0.0
      %875 = vmatprep.subr.mxu0 0.0
      %876 = vmatpush1.msra.mxu0 0.0
      %877 = vmatprep.subr.mxu0 0.0
      %878 = vmatpush1.msra.mxu0 0.0
      %879 = vmatprep.subr.mxu0 0.0
      %880 = vmatpush1.msra.mxu0 0.0
      %881 = vmatprep.subr.mxu0 0.0
      %882 = vmatpush1.msra.mxu0 0.0
      %883 = vmatprep.subr.mxu0 0.0
      %884 = vmatpush1.msra.mxu0 0.0
      %885 = vmatprep.subr.mxu0 0.0
      %886 = vmatpush1.msra.mxu0 0.0
      %887 = vmatprep.subr.mxu0 0.0
      %888 = vmatpush1.msra.mxu0 0.0
      %889 = vmatprep.subr.mxu0 0.0
      %890 = vmatpush1.msra.mxu0 0.0
      %891 = vmatprep.subr.mxu0 0.0
      %892 = vmatpush1.msra.mxu0 0.0
      %893 = vmatprep.subr.mxu0 0.0
      %894 = vmatpush1.msra.mxu0 0.0
      %895 = vmatprep.subr.mxu0 0.0
      %896 = vmatpush1.msra.mxu0 0.0
      %897 = vmatprep.subr.mxu0 0.0
      %898 = vmatpush1.msra.mxu0 0.0
      %899 = vmatprep.subr.mxu0 0.0
      %900 = vmatpush1.msra.mxu0 0.0
      %901 = vmatprep.subr.mxu0 0.0
      %902 = vmatpush1.msra.mxu0 0.0
      %903 = vmatprep.subr.mxu0 0.0
      %904 = vmatpush1.msra.mxu0 0.0
      %905 = vmatprep.subr.mxu0 0.0
      %906 = vmatpush1.msra.mxu0 0.0
      %907 = vmatprep.subr.mxu0 0.0
      %908 = vmatpush1.msra.mxu0 0.0
      %909 = vmatprep.subr.mxu0 0.0
      %910 = vmatpush1.msra.mxu0 0.0
      %911 = vmatprep.subr.mxu0 0.0
      %912 = vmatpush1.msra.mxu0 0.0
      %913 = vmatprep.subr.mxu0 0.0
      %914 = vmatpush1.msra.mxu0 0.0
      %915 = vmatprep.subr.mxu0 0.0
      %916 = vmatpush1.msra.mxu0 0.0
      %917 = vmatprep.subr.mxu0 0.0
      %918 = vmatpush1.msra.mxu0 0.0
      %919 = vmatprep.mubr.f32.mxu0 0.0
      %920 = vmatmul.mubr.f32.gmra.mrb[0].mxu0 %v850
      %v921 = vpop.f32.mrb[0].mxu0
      %v922 = vadd.f32 0.0, %v921
      %v923 = vpop.f32.mrb[0].mxu0
      %924 = vdwg.mxu0
      %s925 = scalar_lea.vmem %s2, 24
      %v926 = vld [vmem:[%s925] sm:$0x1f]
      %s927 = scalar_lea.vmem %s1, 24
      %v928 = vld [vmem:[%s927] sm:$0x1f]
      %v930 = vsel %vm285, %v926, 0
      %932 = vmatprep.subr.mxu0 0.0
      %933 = vmatpush1.msra.mxu0 %v930
      %934 = vmatprep.subr.mxu0 0.0
      %935 = vmatpush1.msra.mxu0 0.0
      %936 = vmatprep.subr.mxu0 0.0
      %937 = vmatpush1.msra.mxu0 0.0
      %938 = vmatprep.subr.mxu0 0.0
      %939 = vmatpush1.msra.mxu0 0.0
      %940 = vmatprep.subr.mxu0 0.0
      %941 = vmatpush1.msra.mxu0 0.0
      %942 = vmatprep.subr.mxu0 0.0
      %943 = vmatpush1.msra.mxu0 0.0
      %944 = vmatprep.subr.mxu0 0.0
      %945 = vmatpush1.msra.mxu0 0.0
      %946 = vmatprep.subr.mxu0 0.0
      %947 = vmatpush1.msra.mxu0 0.0
      %948 = vmatprep.subr.mxu0 0.0
      %949 = vmatpush1.msra.mxu0 0.0
      %950 = vmatprep.subr.mxu0 0.0
      %951 = vmatpush1.msra.mxu0 0.0
      %952 = vmatprep.subr.mxu0 0.0
      %953 = vmatpush1.msra.mxu0 0.0
      %954 = vmatprep.subr.mxu0 0.0
      %955 = vmatpush1.msra.mxu0 0.0
      %956 = vmatprep.subr.mxu0 0.0
      %957 = vmatpush1.msra.mxu0 0.0
      %958 = vmatprep.subr.mxu0 0.0
      %959 = vmatpush1.msra.mxu0 0.0
      %960 = vmatprep.subr.mxu0 0.0
      %961 = vmatpush1.msra.mxu0 0.0
      %962 = vmatprep.subr.mxu0 0.0
      %963 = vmatpush1.msra.mxu0 0.0
      %964 = vmatprep.subr.mxu0 0.0
      %965 = vmatpush1.msra.mxu0 0.0
      %966 = vmatprep.subr.mxu0 0.0
      %967 = vmatpush1.msra.mxu0 0.0
      %968 = vmatprep.subr.mxu0 0.0
      %969 = vmatpush1.msra.mxu0 0.0
      %970 = vmatprep.subr.mxu0 0.0
      %971 = vmatpush1.msra.mxu0 0.0
      %972 = vmatprep.subr.mxu0 0.0
      %973 = vmatpush1.msra.mxu0 0.0
      %974 = vmatprep.subr.mxu0 0.0
      %975 = vmatpush1.msra.mxu0 0.0
      %976 = vmatprep.subr.mxu0 0.0
      %977 = vmatpush1.msra.mxu0 0.0
      %978 = vmatprep.subr.mxu0 0.0
      %979 = vmatpush1.msra.mxu0 0.0
      %980 = vmatprep.subr.mxu0 0.0
      %981 = vmatpush1.msra.mxu0 0.0
      %982 = vmatprep.subr.mxu0 0.0
      %983 = vmatpush1.msra.mxu0 0.0
      %984 = vmatprep.subr.mxu0 0.0
      %985 = vmatpush1.msra.mxu0 0.0
      %986 = vmatprep.subr.mxu0 0.0
      %987 = vmatpush1.msra.mxu0 0.0
      %988 = vmatprep.subr.mxu0 0.0
      %989 = vmatpush1.msra.mxu0 0.0
      %990 = vmatprep.subr.mxu0 0.0
      %991 = vmatpush1.msra.mxu0 0.0
      %992 = vmatprep.subr.mxu0 0.0
      %993 = vmatpush1.msra.mxu0 0.0
      %994 = vmatprep.subr.mxu0 0.0
      %995 = vmatpush1.msra.mxu0 0.0
      %996 = vmatprep.mubr.f32.mxu0 0.0
      %997 = vmatmul.mubr.f32.gmra.mrb[0].mxu0 %v850
      %v998 = vpop.f32.mrb[0].mxu0
      %v999 = vadd.f32 0.0, %v998
      %v1000 = vpop.f32.mrb[0].mxu0
      %1001 = vdwg.mxu0
      %1002 = vxpose.xlu0.b32.start [1/16] %v999, 128
      %1003 = vxpose.xlu0.b32.cont [2/16] 0.0, 128
      %1004 = vxpose.xlu0.b32.cont [3/16] 0.0, 128
      %1005 = vxpose.xlu0.b32.cont [4/16] 0.0, 128
      %1006 = vxpose.xlu0.b32.cont [5/16] 0.0, 128
      %1007 = vxpose.xlu0.b32.cont [6/16] 0.0, 128
      %1008 = vxpose.xlu0.b32.cont [7/16] 0.0, 128
      %1009 = vxpose.xlu0.b32.cont [8/16] 0.0, 128
      %1010 = vxpose.xlu0.b32.cont [9/16] 0.0, 128
      %1011 = vxpose.xlu0.b32.cont [10/16] 0.0, 128
      %1012 = vxpose.xlu0.b32.cont [11/16] 0.0, 128
      %1013 = vxpose.xlu0.b32.cont [12/16] 0.0, 128
      %1014 = vxpose.xlu0.b32.cont [13/16] 0.0, 128
      %1015 = vxpose.xlu0.b32.cont [14/16] 0.0, 128
      %1016 = vxpose.xlu0.b32.cont [15/16] 0.0, 128
      %1017 = vxpose.xlu0.b32.end [16/16] 0.0, 128
      %v1018 = vpop.trf.xlu0
      %v1019 = vpop.trf.xlu0
      %v1020 = vpop.trf.xlu0
      %v1021 = vpop.trf.xlu0
      %v1022 = vpop.trf.xlu0
      %v1023 = vpop.trf.xlu0
      %v1024 = vpop.trf.xlu0
      %v1025 = vpop.trf.xlu0
      %v1026 = vpop.trf.xlu0
      %v1027 = vpop.trf.xlu0
      %v1028 = vpop.trf.xlu0
      %v1029 = vpop.trf.xlu0
      %v1030 = vpop.trf.xlu0
      %v1031 = vpop.trf.xlu0
      %v1032 = vpop.trf.xlu0
      %v1033 = vpop.trf.xlu0
      %v1035 = vsel %vm281, %v1018, 0
      %v1038 = vsel %vm285, %v928, 0
      %1040 = vmatprep.subr.mxu0 0.0
      %1041 = vmatpush1.msra.mxu0 %v1038
      %1042 = vmatprep.subr.mxu0 0.0
      %1043 = vmatpush1.msra.mxu0 0.0
      %1044 = vmatprep.subr.mxu0 0.0
      %1045 = vmatpush1.msra.mxu0 0.0
      %1046 = vmatprep.subr.mxu0 0.0
      %1047 = vmatpush1.msra.mxu0 0.0
      %1048 = vmatprep.subr.mxu0 0.0
      %1049 = vmatpush1.msra.mxu0 0.0
      %1050 = vmatprep.subr.mxu0 0.0
      %1051 = vmatpush1.msra.mxu0 0.0
      %1052 = vmatprep.subr.mxu0 0.0
      %1053 = vmatpush1.msra.mxu0 0.0
      %1054 = vmatprep.subr.mxu0 0.0
      %1055 = vmatpush1.msra.mxu0 0.0
      %1056 = vmatprep.subr.mxu0 0.0
      %1057 = vmatpush1.msra.mxu0 0.0
      %1058 = vmatprep.subr.mxu0 0.0
      %1059 = vmatpush1.msra.mxu0 0.0
      %1060 = vmatprep.subr.mxu0 0.0
      %1061 = vmatpush1.msra.mxu0 0.0
      %1062 = vmatprep.subr.mxu0 0.0
      %1063 = vmatpush1.msra.mxu0 0.0
      %1064 = vmatprep.subr.mxu0 0.0
      %1065 = vmatpush1.msra.mxu0 0.0
      %1066 = vmatprep.subr.mxu0 0.0
      %1067 = vmatpush1.msra.mxu0 0.0
      %1068 = vmatprep.subr.mxu0 0.0
      %1069 = vmatpush1.msra.mxu0 0.0
      %1070 = vmatprep.subr.mxu0 0.0
      %1071 = vmatpush1.msra.mxu0 0.0
      %1072 = vmatprep.subr.mxu0 0.0
      %1073 = vmatpush1.msra.mxu0 0.0
      %1074 = vmatprep.subr.mxu0 0.0
      %1075 = vmatpush1.msra.mxu0 0.0
      %1076 = vmatprep.subr.mxu0 0.0
      %1077 = vmatpush1.msra.mxu0 0.0
      %1078 = vmatprep.subr.mxu0 0.0
      %1079 = vmatpush1.msra.mxu0 0.0
      %1080 = vmatprep.subr.mxu0 0.0
      %1081 = vmatpush1.msra.mxu0 0.0
      %1082 = vmatprep.subr.mxu0 0.0
      %1083 = vmatpush1.msra.mxu0 0.0
      %1084 = vmatprep.subr.mxu0 0.0
      %1085 = vmatpush1.msra.mxu0 0.0
      %1086 = vmatprep.subr.mxu0 0.0
      %1087 = vmatpush1.msra.mxu0 0.0
      %1088 = vmatprep.subr.mxu0 0.0
      %1089 = vmatpush1.msra.mxu0 0.0
      %1090 = vmatprep.subr.mxu0 0.0
      %1091 = vmatpush1.msra.mxu0 0.0
      %1092 = vmatprep.subr.mxu0 0.0
      %1093 = vmatpush1.msra.mxu0 0.0
      %1094 = vmatprep.subr.mxu0 0.0
      %1095 = vmatpush1.msra.mxu0 0.0
      %1096 = vmatprep.subr.mxu0 0.0
      %1097 = vmatpush1.msra.mxu0 0.0
      %1098 = vmatprep.subr.mxu0 0.0
      %1099 = vmatpush1.msra.mxu0 0.0
      %1100 = vmatprep.subr.mxu0 0.0
      %1101 = vmatpush1.msra.mxu0 0.0
      %1102 = vmatprep.subr.mxu0 0.0
      %1103 = vmatpush1.msra.mxu0 0.0
      %1104 = vmatprep.mubr.f32.mxu0 0.0
      %1105 = vmatmul.mubr.f32.gmra.mrb[0].mxu0 %v1035
      %v1106 = vpop.f32.mrb[0].mxu0
      %v1107 = vadd.f32 0.0, %v1106
      %v1108 = vpop.f32.mrb[0].mxu0
      %1109 = vdwg.mxu0
      %1110 = vxpose.xlu0.b32.start [1/16] %v922, 128
      %1111 = vxpose.xlu0.b32.cont [2/16] 0.0, 128
      %1112 = vxpose.xlu0.b32.cont [3/16] 0.0, 128
      %1113 = vxpose.xlu0.b32.cont [4/16] 0.0, 128
      %1114 = vxpose.xlu0.b32.cont [5/16] 0.0, 128
      %1115 = vxpose.xlu0.b32.cont [6/16] 0.0, 128
      %1116 = vxpose.xlu0.b32.cont [7/16] 0.0, 128
      %1117 = vxpose.xlu0.b32.cont [8/16] 0.0, 128
      %1118 = vxpose.xlu0.b32.cont [9/16] 0.0, 128
      %1119 = vxpose.xlu0.b32.cont [10/16] 0.0, 128
      %1120 = vxpose.xlu0.b32.cont [11/16] 0.0, 128
      %1121 = vxpose.xlu0.b32.cont [12/16] 0.0, 128
      %1122 = vxpose.xlu0.b32.cont [13/16] 0.0, 128
      %1123 = vxpose.xlu0.b32.cont [14/16] 0.0, 128
      %1124 = vxpose.xlu0.b32.cont [15/16] 0.0, 128
      %1125 = vxpose.xlu0.b32.end [16/16] 0.0, 128
      %v1126 = vpop.trf.xlu0
      %v1127 = vpop.trf.xlu0
      %v1128 = vpop.trf.xlu0
      %v1129 = vpop.trf.xlu0
      %v1130 = vpop.trf.xlu0
      %v1131 = vpop.trf.xlu0
      %v1132 = vpop.trf.xlu0
      %v1133 = vpop.trf.xlu0
      %v1134 = vpop.trf.xlu0
      %v1135 = vpop.trf.xlu0
      %v1136 = vpop.trf.xlu0
      %v1137 = vpop.trf.xlu0
      %v1138 = vpop.trf.xlu0
      %v1139 = vpop.trf.xlu0
      %v1140 = vpop.trf.xlu0
      %v1141 = vpop.trf.xlu0
      %v1143 = vsel %vm281, %v1126, 0
      %v1146 = vsel %vm285, %v848, 0
      %1148 = vmatprep.subr.mxu0 0.0
      %1149 = vmatpush1.msra.mxu0 %v1146
      %1150 = vmatprep.subr.mxu0 0.0
      %1151 = vmatpush1.msra.mxu0 0.0
      %1152 = vmatprep.subr.mxu0 0.0
      %1153 = vmatpush1.msra.mxu0 0.0
      %1154 = vmatprep.subr.mxu0 0.0
      %1155 = vmatpush1.msra.mxu0 0.0
      %1156 = vmatprep.subr.mxu0 0.0
      %1157 = vmatpush1.msra.mxu0 0.0
      %1158 = vmatprep.subr.mxu0 0.0
      %1159 = vmatpush1.msra.mxu0 0.0
      %1160 = vmatprep.subr.mxu0 0.0
      %1161 = vmatpush1.msra.mxu0 0.0
      %1162 = vmatprep.subr.mxu0 0.0
      %1163 = vmatpush1.msra.mxu0 0.0
      %1164 = vmatprep.subr.mxu0 0.0
      %1165 = vmatpush1.msra.mxu0 0.0
      %1166 = vmatprep.subr.mxu0 0.0
      %1167 = vmatpush1.msra.mxu0 0.0
      %1168 = vmatprep.subr.mxu0 0.0
      %1169 = vmatpush1.msra.mxu0 0.0
      %1170 = vmatprep.subr.mxu0 0.0
      %1171 = vmatpush1.msra.mxu0 0.0
      %1172 = vmatprep.subr.mxu0 0.0
      %1173 = vmatpush1.msra.mxu0 0.0
      %1174 = vmatprep.subr.mxu0 0.0
      %1175 = vmatpush1.msra.mxu0 0.0
      %1176 = vmatprep.subr.mxu0 0.0
      %1177 = vmatpush1.msra.mxu0 0.0
      %1178 = vmatprep.subr.mxu0 0.0
      %1179 = vmatpush1.msra.mxu0 0.0
      %1180 = vmatprep.subr.mxu0 0.0
      %1181 = vmatpush1.msra.mxu0 0.0
      %1182 = vmatprep.subr.mxu0 0.0
      %1183 = vmatpush1.msra.mxu0 0.0
      %1184 = vmatprep.subr.mxu0 0.0
      %1185 = vmatpush1.msra.mxu0 0.0
      %1186 = vmatprep.subr.mxu0 0.0
      %1187 = vmatpush1.msra.mxu0 0.0
      %1188 = vmatprep.subr.mxu0 0.0
      %1189 = vmatpush1.msra.mxu0 0.0
      %1190 = vmatprep.subr.mxu0 0.0
      %1191 = vmatpush1.msra.mxu0 0.0
      %1192 = vmatprep.subr.mxu0 0.0
      %1193 = vmatpush1.msra.mxu0 0.0
      %1194 = vmatprep.subr.mxu0 0.0
      %1195 = vmatpush1.msra.mxu0 0.0
      %1196 = vmatprep.subr.mxu0 0.0
      %1197 = vmatpush1.msra.mxu0 0.0
      %1198 = vmatprep.subr.mxu0 0.0
      %1199 = vmatpush1.msra.mxu0 0.0
      %1200 = vmatprep.subr.mxu0 0.0
      %1201 = vmatpush1.msra.mxu0 0.0
      %1202 = vmatprep.subr.mxu0 0.0
      %1203 = vmatpush1.msra.mxu0 0.0
      %1204 = vmatprep.subr.mxu0 0.0
      %1205 = vmatpush1.msra.mxu0 0.0
      %1206 = vmatprep.subr.mxu0 0.0
      %1207 = vmatpush1.msra.mxu0 0.0
      %1208 = vmatprep.subr.mxu0 0.0
      %1209 = vmatpush1.msra.mxu0 0.0
      %1210 = vmatprep.subr.mxu0 0.0
      %1211 = vmatpush1.msra.mxu0 0.0
      %1212 = vmatprep.mubr.f32.mxu0 0.0
      %1213 = vmatmul.mubr.f32.gmra.mrb[0].mxu0 %v1143
      %v1214 = vpop.f32.mrb[0].mxu0
      %v1215 = vadd.f32 %v1107, %v1214
      %v1216 = vpop.f32.mrb[0].mxu0
      %1217 = vdwg.mxu0
      %v1219 = vsel %vm281, %v738, 0
      %v1222 = vsel %vm281, %v739, 0
      %v1225 = vsel %vm281, %v1215, 0
      %1227 = vmatprep.subr.mxu0 0.0
      %1228 = vmatpush1.xpose.msra.mxu0 %v1225
      %1229 = vmatprep.subr.mxu0 0.0
      %1230 = vmatpush1.xpose.msra.mxu0 0.0
      %1231 = vmatprep.subr.mxu0 0.0
      %1232 = vmatpush1.xpose.msra.mxu0 0.0
      %1233 = vmatprep.subr.mxu0 0.0
      %1234 = vmatpush1.xpose.msra.mxu0 0.0
      %1235 = vmatprep.subr.mxu0 0.0
      %1236 = vmatpush1.xpose.msra.mxu0 0.0
      %1237 = vmatprep.subr.mxu0 0.0
      %1238 = vmatpush1.xpose.msra.mxu0 0.0
      %1239 = vmatprep.subr.mxu0 0.0
      %1240 = vmatpush1.xpose.msra.mxu0 0.0
      %1241 = vmatprep.subr.mxu0 0.0
      %1242 = vmatpush1.xpose.msra.mxu0 0.0
      %1243 = vmatprep.subr.mxu0 0.0
      %1244 = vmatpush1.xpose.msra.mxu0 0.0
      %1245 = vmatprep.subr.mxu0 0.0
      %1246 = vmatpush1.xpose.msra.mxu0 0.0
      %1247 = vmatprep.subr.mxu0 0.0
      %1248 = vmatpush1.xpose.msra.mxu0 0.0
      %1249 = vmatprep.subr.mxu0 0.0
      %1250 = vmatpush1.xpose.msra.mxu0 0.0
      %1251 = vmatprep.subr.mxu0 0.0
      %1252 = vmatpush1.xpose.msra.mxu0 0.0
      %1253 = vmatprep.subr.mxu0 0.0
      %1254 = vmatpush1.xpose.msra.mxu0 0.0
      %1255 = vmatprep.subr.mxu0 0.0
      %1256 = vmatpush1.xpose.msra.mxu0 0.0
      %1257 = vmatprep.subr.mxu0 0.0
      %1258 = vmatpush1.xpose.msra.mxu0 0.0
      %1259 = vmatprep.subr.mxu0 0.0
      %1260 = vmatpush1.xpose.msra.mxu0 0.0
      %1261 = vmatprep.subr.mxu0 0.0
      %1262 = vmatpush1.xpose.msra.mxu0 0.0
      %1263 = vmatprep.subr.mxu0 0.0
      %1264 = vmatpush1.xpose.msra.mxu0 0.0
      %1265 = vmatprep.subr.mxu0 0.0
      %1266 = vmatpush1.xpose.msra.mxu0 0.0
      %1267 = vmatprep.subr.mxu0 0.0
      %1268 = vmatpush1.xpose.msra.mxu0 0.0
      %1269 = vmatprep.subr.mxu0 0.0
      %1270 = vmatpush1.xpose.msra.mxu0 0.0
      %1271 = vmatprep.subr.mxu0 0.0
      %1272 = vmatpush1.xpose.msra.mxu0 0.0
      %1273 = vmatprep.subr.mxu0 0.0
      %1274 = vmatpush1.xpose.msra.mxu0 0.0
      %1275 = vmatprep.subr.mxu0 0.0
      %1276 = vmatpush1.xpose.msra.mxu0 0.0
      %1277 = vmatprep.subr.mxu0 0.0
      %1278 = vmatpush1.xpose.msra.mxu0 0.0
      %1279 = vmatprep.subr.mxu0 0.0
      %1280 = vmatpush1.xpose.msra.mxu0 0.0
      %1281 = vmatprep.subr.mxu0 0.0
      %1282 = vmatpush1.xpose.msra.mxu0 0.0
      %1283 = vmatprep.subr.mxu0 0.0
      %1284 = vmatpush1.xpose.msra.mxu0 0.0
      %1285 = vmatprep.subr.mxu0 0.0
      %1286 = vmatpush1.xpose.msra.mxu0 0.0
      %1287 = vmatprep.subr.mxu0 0.0
      %1288 = vmatpush1.xpose.msra.mxu0 0.0
      %1289 = vmatprep.subr.mxu0 0.0
      %1290 = vmatpush1.xpose.msra.mxu0 0.0
      %1291 = vmatprep.mubr.f32.mxu0 0.0
      %1292 = vmatmul.mubr.f32.gmra.mrb[0].mxu0 %v1219
      %v1293 = vpop.f32.mrb[0].mxu0
      %v1294 = vadd.f32 0.0, %v1293
      %v1295 = vpop.f32.mrb[0].mxu0
      %1296 = vmatprep.mubr.f32.mxu0 0.0
      %1297 = vmatmul.mubr.f32.gmra.mrb[0].mxu0 %v1222
      %v1298 = vpop.f32.mrb[0].mxu0
      %v1299 = vadd.f32 0.0, %v1298
      %v1300 = vpop.f32.mrb[0].mxu0
      %1301 = vdwg.mxu0
      %v1302 = vmul.f32 %v1294, 0.125
      %v1303 = vmul.f32 %v1299, 0.125
      %v1304 = vadd.f32 %v738, %v1302
      %v1305 = vadd.f32 %v739, %v1303
      %1306 = vxpose.xlu0.b32.start [1/16] %v1304, 128
      %1307 = vxpose.xlu0.b32.cont [2/16] 0.0, 128
      %1308 = vxpose.xlu0.b32.cont [3/16] 0.0, 128
      %1309 = vxpose.xlu0.b32.cont [4/16] 0.0, 128
      %1310 = vxpose.xlu0.b32.cont [5/16] 0.0, 128
      %1311 = vxpose.xlu0.b32.cont [6/16] 0.0, 128
      %1312 = vxpose.xlu0.b32.cont [7/16] 0.0, 128
      %1313 = vxpose.xlu0.b32.cont [8/16] 0.0, 128
      %1314 = vxpose.xlu0.b32.cont [9/16] 0.0, 128
      %1315 = vxpose.xlu0.b32.cont [10/16] 0.0, 128
      %1316 = vxpose.xlu0.b32.cont [11/16] 0.0, 128
      %1317 = vxpose.xlu0.b32.cont [12/16] 0.0, 128
      %1318 = vxpose.xlu0.b32.cont [13/16] 0.0, 128
      %1319 = vxpose.xlu0.b32.cont [14/16] 0.0, 128
      %1320 = vxpose.xlu0.b32.cont [15/16] 0.0, 128
      %1321 = vxpose.xlu0.b32.end [16/16] 0.0, 128
      %v1322 = vpop.trf.xlu0
      %v1323 = vpop.trf.xlu0
      %v1324 = vpop.trf.xlu0
      %v1325 = vpop.trf.xlu0
      %v1326 = vpop.trf.xlu0
      %v1327 = vpop.trf.xlu0
      %v1328 = vpop.trf.xlu0
      %v1329 = vpop.trf.xlu0
      %v1330 = vpop.trf.xlu0
      %v1331 = vpop.trf.xlu0
      %v1332 = vpop.trf.xlu0
      %v1333 = vpop.trf.xlu0
      %v1334 = vpop.trf.xlu0
      %v1335 = vpop.trf.xlu0
      %v1336 = vpop.trf.xlu0
      %v1337 = vpop.trf.xlu0
      %v1339 = vsel %vm205, %v1322, 0
      %1341 = vmatprep.subr.mxu0 0.0
      %1342 = vmatpush1.msra.mxu0 %v1304
      %1343 = vmatprep.subr.mxu0 0.0
      %1344 = vmatpush1.msra.mxu0 0.0
      %1345 = vmatprep.subr.mxu0 0.0
      %1346 = vmatpush1.msra.mxu0 0.0
      %1347 = vmatprep.subr.mxu0 0.0
      %1348 = vmatpush1.msra.mxu0 0.0
      %1349 = vmatprep.subr.mxu0 0.0
      %1350 = vmatpush1.msra.mxu0 0.0
      %1351 = vmatprep.subr.mxu0 0.0
      %1352 = vmatpush1.msra.mxu0 0.0
      %1353 = vmatprep.subr.mxu0 0.0
      %1354 = vmatpush1.msra.mxu0 0.0
      %1355 = vmatprep.subr.mxu0 0.0
      %1356 = vmatpush1.msra.mxu0 0.0
      %1357 = vmatprep.subr.mxu0 0.0
      %1358 = vmatpush1.msra.mxu0 0.0
      %1359 = vmatprep.subr.mxu0 0.0
      %1360 = vmatpush1.msra.mxu0 0.0
      %1361 = vmatprep.subr.mxu0 0.0
      %1362 = vmatpush1.msra.mxu0 0.0
      %1363 = vmatprep.subr.mxu0 0.0
      %1364 = vmatpush1.msra.mxu0 0.0
      %1365 = vmatprep.subr.mxu0 0.0
      %1366 = vmatpush1.msra.mxu0 0.0
      %1367 = vmatprep.subr.mxu0 0.0
      %1368 = vmatpush1.msra.mxu0 0.0
      %1369 = vmatprep.subr.mxu0 0.0
      %1370 = vmatpush1.msra.mxu0 0.0
      %1371 = vmatprep.subr.mxu0 0.0
      %1372 = vmatpush1.msra.mxu0 0.0
      %1373 = vmatprep.subr.mxu0 0.0
      %1374 = vmatpush1.msra.mxu0 0.0
      %1375 = vmatprep.subr.mxu0 0.0
      %1376 = vmatpush1.msra.mxu0 0.0
      %1377 = vmatprep.subr.mxu0 0.0
      %1378 = vmatpush1.msra.mxu0 0.0
      %1379 = vmatprep.subr.mxu0 0.0
      %1380 = vmatpush1.msra.mxu0 0.0
      %1381 = vmatprep.subr.mxu0 0.0
      %1382 = vmatpush1.msra.mxu0 0.0
      %1383 = vmatprep.subr.mxu0 0.0
      %1384 = vmatpush1.msra.mxu0 0.0
      %1385 = vmatprep.subr.mxu0 0.0
      %1386 = vmatpush1.msra.mxu0 0.0
      %1387 = vmatprep.subr.mxu0 0.0
      %1388 = vmatpush1.msra.mxu0 0.0
      %1389 = vmatprep.subr.mxu0 0.0
      %1390 = vmatpush1.msra.mxu0 0.0
      %1391 = vmatprep.subr.mxu0 0.0
      %1392 = vmatpush1.msra.mxu0 0.0
      %1393 = vmatprep.subr.mxu0 0.0
      %1394 = vmatpush1.msra.mxu0 0.0
      %1395 = vmatprep.subr.mxu0 0.0
      %1396 = vmatpush1.msra.mxu0 0.0
      %1397 = vmatprep.subr.mxu0 0.0
      %1398 = vmatpush1.msra.mxu0 0.0
      %1399 = vmatprep.subr.mxu0 0.0
      %1400 = vmatpush1.msra.mxu0 0.0
      %1401 = vmatprep.subr.mxu0 0.0
      %1402 = vmatpush1.msra.mxu0 0.0
      %1403 = vmatprep.subr.mxu0 0.0
      %1404 = vmatpush1.msra.mxu0 0.0
      %1405 = vmatprep.mubr.f32.mxu0 0.0
      %1406 = vmatmul.mubr.f32.gmra.mrb[0].mxu0 %v1339
      %v1407 = vpop.f32.mrb[0].mxu0
      %v1408 = vadd.f32 0.0, %v1407
      %v1409 = vpop.f32.mrb[0].mxu0
      %1410 = vdwg.mxu0
      %s1411 = scalar_lea.vmem %s2, 32
      %v1412 = vld [vmem:[%s1411] sm:$0x1f]
      %s1413 = scalar_lea.vmem %s1, 32
      %v1414 = vld [vmem:[%s1413] sm:$0x1f]
      %v1416 = vsel %vm281, %v1408, 0
      %v1419 = vsel %vm285, %v1412, 0
      %1421 = vmatprep.subr.mxu0 0.0
      %1422 = vmatpush1.msra.mxu0 %v1419
      %1423 = vmatprep.subr.mxu0 0.0
      %1424 = vmatpush1.msra.mxu0 0.0
      %1425 = vmatprep.subr.mxu0 0.0
      %1426 = vmatpush1.msra.mxu0 0.0
      %1427 = vmatprep.subr.mxu0 0.0
      %1428 = vmatpush1.msra.mxu0 0.0
      %1429 = vmatprep.subr.mxu0 0.0
      %1430 = vmatpush1.msra.mxu0 0.0
      %1431 = vmatprep.subr.mxu0 0.0
      %1432 = vmatpush1.msra.mxu0 0.0
      %1433 = vmatprep.subr.mxu0 0.0
      %1434 = vmatpush1.msra.mxu0 0.0
      %1435 = vmatprep.subr.mxu0 0.0
      %1436 = vmatpush1.msra.mxu0 0.0
      %1437 = vmatprep.subr.mxu0 0.0
      %1438 = vmatpush1.msra.mxu0 0.0
      %1439 = vmatprep.subr.mxu0 0.0
      %1440 = vmatpush1.msra.mxu0 0.0
      %1441 = vmatprep.subr.mxu0 0.0
      %1442 = vmatpush1.msra.mxu0 0.0
      %1443 = vmatprep.subr.mxu0 0.0
      %1444 = vmatpush1.msra.mxu0 0.0
      %1445 = vmatprep.subr.mxu0 0.0
      %1446 = vmatpush1.msra.mxu0 0.0
      %1447 = vmatprep.subr.mxu0 0.0
      %1448 = vmatpush1.msra.mxu0 0.0
      %1449 = vmatprep.subr.mxu0 0.0
      %1450 = vmatpush1.msra.mxu0 0.0
      %1451 = vmatprep.subr.mxu0 0.0
      %1452 = vmatpush1.msra.mxu0 0.0
      %1453 = vmatprep.subr.mxu0 0.0
      %1454 = vmatpush1.msra.mxu0 0.0
      %1455 = vmatprep.subr.mxu0 0.0
      %1456 = vmatpush1.msra.mxu0 0.0
      %1457 = vmatprep.subr.mxu0 0.0
      %1458 = vmatpush1.msra.mxu0 0.0
      %1459 = vmatprep.subr.mxu0 0.0
      %1460 = vmatpush1.msra.mxu0 0.0
      %1461 = vmatprep.subr.mxu0 0.0
      %1462 = vmatpush1.msra.mxu0 0.0
      %1463 = vmatprep.subr.mxu0 0.0
      %1464 = vmatpush1.msra.mxu0 0.0
      %1465 = vmatprep.subr.mxu0 0.0
      %1466 = vmatpush1.msra.mxu0 0.0
      %1467 = vmatprep.subr.mxu0 0.0
      %1468 = vmatpush1.msra.mxu0 0.0
      %1469 = vmatprep.subr.mxu0 0.0
      %1470 = vmatpush1.msra.mxu0 0.0
      %1471 = vmatprep.subr.mxu0 0.0
      %1472 = vmatpush1.msra.mxu0 0.0
      %1473 = vmatprep.subr.mxu0 0.0
      %1474 = vmatpush1.msra.mxu0 0.0
      %1475 = vmatprep.subr.mxu0 0.0
      %1476 = vmatpush1.msra.mxu0 0.0
      %1477 = vmatprep.subr.mxu0 0.0
      %1478 = vmatpush1.msra.mxu0 0.0
      %1479 = vmatprep.subr.mxu0 0.0
      %1480 = vmatpush1.msra.mxu0 0.0
      %1481 = vmatprep.subr.mxu0 0.0
      %1482 = vmatpush1.msra.mxu0 0.0
      %1483 = vmatprep.subr.mxu0 0.0
      %1484 = vmatpush1.msra.mxu0 0.0
      %1485 = vmatprep.mubr.f32.mxu0 0.0
      %1486 = vmatmul.mubr.f32.gmra.mrb[0].mxu0 %v1416
      %v1487 = vpop.f32.mrb[0].mxu0
      %v1488 = vadd.f32 0.0, %v1487
      %v1489 = vpop.f32.mrb[0].mxu0
      %1490 = vdwg.mxu0
      %s1491 = scalar_lea.vmem %s2, 40
      %v1492 = vld [vmem:[%s1491] sm:$0x1f]
      %s1493 = scalar_lea.vmem %s1, 40
      %v1494 = vld [vmem:[%s1493] sm:$0x1f]
      %v1496 = vsel %vm285, %v1492, 0
      %1498 = vmatprep.subr.mxu0 0.0
      %1499 = vmatpush1.msra.mxu0 %v1496
      %1500 = vmatprep.subr.mxu0 0.0
      %1501 = vmatpush1.msra.mxu0 0.0
      %1502 = vmatprep.subr.mxu0 0.0
      %1503 = vmatpush1.msra.mxu0 0.0
      %1504 = vmatprep.subr.mxu0 0.0
      %1505 = vmatpush1.msra.mxu0 0.0
      %1506 = vmatprep.subr.mxu0 0.0
      %1507 = vmatpush1.msra.mxu0 0.0
      %1508 = vmatprep.subr.mxu0 0.0
      %1509 = vmatpush1.msra.mxu0 0.0
      %1510 = vmatprep.subr.mxu0 0.0
      %1511 = vmatpush1.msra.mxu0 0.0
      %1512 = vmatprep.subr.mxu0 0.0
      %1513 = vmatpush1.msra.mxu0 0.0
      %1514 = vmatprep.subr.mxu0 0.0
      %1515 = vmatpush1.msra.mxu0 0.0
      %1516 = vmatprep.subr.mxu0 0.0
      %1517 = vmatpush1.msra.mxu0 0.0
      %1518 = vmatprep.subr.mxu0 0.0
      %1519 = vmatpush1.msra.mxu0 0.0
      %1520 = vmatprep.subr.mxu0 0.0
      %1521 = vmatpush1.msra.mxu0 0.0
      %1522 = vmatprep.subr.mxu0 0.0
      %1523 = vmatpush1.msra.mxu0 0.0
      %1524 = vmatprep.subr.mxu0 0.0
      %1525 = vmatpush1.msra.mxu0 0.0
      %1526 = vmatprep.subr.mxu0 0.0
      %1527 = vmatpush1.msra.mxu0 0.0
      %1528 = vmatprep.subr.mxu0 0.0
      %1529 = vmatpush1.msra.mxu0 0.0
      %1530 = vmatprep.subr.mxu0 0.0
      %1531 = vmatpush1.msra.mxu0 0.0
      %1532 = vmatprep.subr.mxu0 0.0
      %1533 = vmatpush1.msra.mxu0 0.0
      %1534 = vmatprep.subr.mxu0 0.0
      %1535 = vmatpush1.msra.mxu0 0.0
      %1536 = vmatprep.subr.mxu0 0.0
      %1537 = vmatpush1.msra.mxu0 0.0
      %1538 = vmatprep.subr.mxu0 0.0
      %1539 = vmatpush1.msra.mxu0 0.0
      %1540 = vmatprep.subr.mxu0 0.0
      %1541 = vmatpush1.msra.mxu0 0.0
      %1542 = vmatprep.subr.mxu0 0.0
      %1543 = vmatpush1.msra.mxu0 0.0
      %1544 = vmatprep.subr.mxu0 0.0
      %1545 = vmatpush1.msra.mxu0 0.0
      %1546 = vmatprep.subr.mxu0 0.0
      %1547 = vmatpush1.msra.mxu0 0.0
      %1548 = vmatprep.subr.mxu0 0.0
      %1549 = vmatpush1.msra.mxu0 0.0
      %1550 = vmatprep.subr.mxu0 0.0
      %1551 = vmatpush1.msra.mxu0 0.0
      %1552 = vmatprep.subr.mxu0 0.0
      %1553 = vmatpush1.msra.mxu0 0.0
      %1554 = vmatprep.subr.mxu0 0.0
      %1555 = vmatpush1.msra.mxu0 0.0
      %1556 = vmatprep.subr.mxu0 0.0
      %1557 = vmatpush1.msra.mxu0 0.0
      %1558 = vmatprep.subr.mxu0 0.0
      %1559 = vmatpush1.msra.mxu0 0.0
      %1560 = vmatprep.subr.mxu0 0.0
      %1561 = vmatpush1.msra.mxu0 0.0
      %1562 = vmatprep.mubr.f32.mxu0 0.0
      %1563 = vmatmul.mubr.f32.gmra.mrb[0].mxu0 %v1416
      %v1564 = vpop.f32.mrb[0].mxu0
      %v1565 = vadd.f32 0.0, %v1564
      %v1566 = vpop.f32.mrb[0].mxu0
      %1567 = vdwg.mxu0
      %1568 = vxpose.xlu0.b32.start [1/16] %v1565, 128
      %1569 = vxpose.xlu0.b32.cont [2/16] 0.0, 128
      %1570 = vxpose.xlu0.b32.cont [3/16] 0.0, 128
      %1571 = vxpose.xlu0.b32.cont [4/16] 0.0, 128
      %1572 = vxpose.xlu0.b32.cont [5/16] 0.0, 128
      %1573 = vxpose.xlu0.b32.cont [6/16] 0.0, 128
      %1574 = vxpose.xlu0.b32.cont [7/16] 0.0, 128
      %1575 = vxpose.xlu0.b32.cont [8/16] 0.0, 128
      %1576 = vxpose.xlu0.b32.cont [9/16] 0.0, 128
      %1577 = vxpose.xlu0.b32.cont [10/16] 0.0, 128
      %1578 = vxpose.xlu0.b32.cont [11/16] 0.0, 128
      %1579 = vxpose.xlu0.b32.cont [12/16] 0.0, 128
      %1580 = vxpose.xlu0.b32.cont [13/16] 0.0, 128
      %1581 = vxpose.xlu0.b32.cont [14/16] 0.0, 128
      %1582 = vxpose.xlu0.b32.cont [15/16] 0.0, 128
      %1583 = vxpose.xlu0.b32.end [16/16] 0.0, 128
      %v1584 = vpop.trf.xlu0
      %v1585 = vpop.trf.xlu0
      %v1586 = vpop.trf.xlu0
      %v1587 = vpop.trf.xlu0
      %v1588 = vpop.trf.xlu0
      %v1589 = vpop.trf.xlu0
      %v1590 = vpop.trf.xlu0
      %v1591 = vpop.trf.xlu0
      %v1592 = vpop.trf.xlu0
      %v1593 = vpop.trf.xlu0
      %v1594 = vpop.trf.xlu0
      %v1595 = vpop.trf.xlu0
      %v1596 = vpop.trf.xlu0
      %v1597 = vpop.trf.xlu0
      %v1598 = vpop.trf.xlu0
      %v1599 = vpop.trf.xlu0
      %v1601 = vsel %vm281, %v1584, 0
      %v1604 = vsel %vm285, %v1494, 0
      %1606 = vmatprep.subr.mxu0 0.0
      %1607 = vmatpush1.msra.mxu0 %v1604
      %1608 = vmatprep.subr.mxu0 0.0
      %1609 = vmatpush1.msra.mxu0 0.0
      %1610 = vmatprep.subr.mxu0 0.0
      %1611 = vmatpush1.msra.mxu0 0.0
      %1612 = vmatprep.subr.mxu0 0.0
      %1613 = vmatpush1.msra.mxu0 0.0
      %1614 = vmatprep.subr.mxu0 0.0
      %1615 = vmatpush1.msra.mxu0 0.0
      %1616 = vmatprep.subr.mxu0 0.0
      %1617 = vmatpush1.msra.mxu0 0.0
      %1618 = vmatprep.subr.mxu0 0.0
      %1619 = vmatpush1.msra.mxu0 0.0
      %1620 = vmatprep.subr.mxu0 0.0
      %1621 = vmatpush1.msra.mxu0 0.0
      %1622 = vmatprep.subr.mxu0 0.0
      %1623 = vmatpush1.msra.mxu0 0.0
      %1624 = vmatprep.subr.mxu0 0.0
      %1625 = vmatpush1.msra.mxu0 0.0
      %1626 = vmatprep.subr.mxu0 0.0
      %1627 = vmatpush1.msra.mxu0 0.0
      %1628 = vmatprep.subr.mxu0 0.0
      %1629 = vmatpush1.msra.mxu0 0.0
      %1630 = vmatprep.subr.mxu0 0.0
      %1631 = vmatpush1.msra.mxu0 0.0
      %1632 = vmatprep.subr.mxu0 0.0
      %1633 = vmatpush1.msra.mxu0 0.0
      %1634 = vmatprep.subr.mxu0 0.0
      %1635 = vmatpush1.msra.mxu0 0.0
      %1636 = vmatprep.subr.mxu0 0.0
      %1637 = vmatpush1.msra.mxu0 0.0
      %1638 = vmatprep.subr.mxu0 0.0
      %1639 = vmatpush1.msra.mxu0 0.0
      %1640 = vmatprep.subr.mxu0 0.0
      %1641 = vmatpush1.msra.mxu0 0.0
      %1642 = vmatprep.subr.mxu0 0.0
      %1643 = vmatpush1.msra.mxu0 0.0
      %1644 = vmatprep.subr.mxu0 0.0
      %1645 = vmatpush1.msra.mxu0 0.0
      %1646 = vmatprep.subr.mxu0 0.0
      %1647 = vmatpush1.msra.mxu0 0.0
      %1648 = vmatprep.subr.mxu0 0.0
      %1649 = vmatpush1.msra.mxu0 0.0
      %1650 = vmatprep.subr.mxu0 0.0
      %1651 = vmatpush1.msra.mxu0 0.0
      %1652 = vmatprep.subr.mxu0 0.0
      %1653 = vmatpush1.msra.mxu0 0.0
      %1654 = vmatprep.subr.mxu0 0.0
      %1655 = vmatpush1.msra.mxu0 0.0
      %1656 = vmatprep.subr.mxu0 0.0
      %1657 = vmatpush1.msra.mxu0 0.0
      %1658 = vmatprep.subr.mxu0 0.0
      %1659 = vmatpush1.msra.mxu0 0.0
      %1660 = vmatprep.subr.mxu0 0.0
      %1661 = vmatpush1.msra.mxu0 0.0
      %1662 = vmatprep.subr.mxu0 0.0
      %1663 = vmatpush1.msra.mxu0 0.0
      %1664 = vmatprep.subr.mxu0 0.0
      %1665 = vmatpush1.msra.mxu0 0.0
      %1666 = vmatprep.subr.mxu0 0.0
      %1667 = vmatpush1.msra.mxu0 0.0
      %1668 = vmatprep.subr.mxu0 0.0
      %1669 = vmatpush1.msra.mxu0 0.0
      %1670 = vmatprep.mubr.f32.mxu0 0.0
      %1671 = vmatmul.mubr.f32.gmra.mrb[0].mxu0 %v1601
      %v1672 = vpop.f32.mrb[0].mxu0
      %v1673 = vadd.f32 0.0, %v1672
      %v1674 = vpop.f32.mrb[0].mxu0
      %1675 = vdwg.mxu0
      %1676 = vxpose.xlu0.b32.start [1/16] %v1488, 128
      %1677 = vxpose.xlu0.b32.cont [2/16] 0.0, 128
      %1678 = vxpose.xlu0.b32.cont [3/16] 0.0, 128
      %1679 = vxpose.xlu0.b32.cont [4/16] 0.0, 128
      %1680 = vxpose.xlu0.b32.cont [5/16] 0.0, 128
      %1681 = vxpose.xlu0.b32.cont [6/16] 0.0, 128
      %1682 = vxpose.xlu0.b32.cont [7/16] 0.0, 128
      %1683 = vxpose.xlu0.b32.cont [8/16] 0.0, 128
      %1684 = vxpose.xlu0.b32.cont [9/16] 0.0, 128
      %1685 = vxpose.xlu0.b32.cont [10/16] 0.0, 128
      %1686 = vxpose.xlu0.b32.cont [11/16] 0.0, 128
      %1687 = vxpose.xlu0.b32.cont [12/16] 0.0, 128
      %1688 = vxpose.xlu0.b32.cont [13/16] 0.0, 128
      %1689 = vxpose.xlu0.b32.cont [14/16] 0.0, 128
      %1690 = vxpose.xlu0.b32.cont [15/16] 0.0, 128
      %1691 = vxpose.xlu0.b32.end [16/16] 0.0, 128
      %v1692 = vpop.trf.xlu0
      %v1693 = vpop.trf.xlu0
      %v1694 = vpop.trf.xlu0
      %v1695 = vpop.trf.xlu0
      %v1696 = vpop.trf.xlu0
      %v1697 = vpop.trf.xlu0
      %v1698 = vpop.trf.xlu0
      %v1699 = vpop.trf.xlu0
      %v1700 = vpop.trf.xlu0
      %v1701 = vpop.trf.xlu0
      %v1702 = vpop.trf.xlu0
      %v1703 = vpop.trf.xlu0
      %v1704 = vpop.trf.xlu0
      %v1705 = vpop.trf.xlu0
      %v1706 = vpop.trf.xlu0
      %v1707 = vpop.trf.xlu0
      %v1709 = vsel %vm281, %v1692, 0
      %v1712 = vsel %vm285, %v1414, 0
      %1714 = vmatprep.subr.mxu0 0.0
      %1715 = vmatpush1.msra.mxu0 %v1712
      %1716 = vmatprep.subr.mxu0 0.0
      %1717 = vmatpush1.msra.mxu0 0.0
      %1718 = vmatprep.subr.mxu0 0.0
      %1719 = vmatpush1.msra.mxu0 0.0
      %1720 = vmatprep.subr.mxu0 0.0
      %1721 = vmatpush1.msra.mxu0 0.0
      %1722 = vmatprep.subr.mxu0 0.0
      %1723 = vmatpush1.msra.mxu0 0.0
      %1724 = vmatprep.subr.mxu0 0.0
      %1725 = vmatpush1.msra.mxu0 0.0
      %1726 = vmatprep.subr.mxu0 0.0
      %1727 = vmatpush1.msra.mxu0 0.0
      %1728 = vmatprep.subr.mxu0 0.0
      %1729 = vmatpush1.msra.mxu0 0.0
      %1730 = vmatprep.subr.mxu0 0.0
      %1731 = vmatpush1.msra.mxu0 0.0
      %1732 = vmatprep.subr.mxu0 0.0
      %1733 = vmatpush1.msra.mxu0 0.0
      %1734 = vmatprep.subr.mxu0 0.0
      %1735 = vmatpush1.msra.mxu0 0.0
      %1736 = vmatprep.subr.mxu0 0.0
      %1737 = vmatpush1.msra.mxu0 0.0
      %1738 = vmatprep.subr.mxu0 0.0
      %1739 = vmatpush1.msra.mxu0 0.0
      %1740 = vmatprep.subr.mxu0 0.0
      %1741 = vmatpush1.msra.mxu0 0.0
      %1742 = vmatprep.subr.mxu0 0.0
      %1743 = vmatpush1.msra.mxu0 0.0
      %1744 = vmatprep.subr.mxu0 0.0
      %1745 = vmatpush1.msra.mxu0 0.0
      %1746 = vmatprep.subr.mxu0 0.0
      %1747 = vmatpush1.msra.mxu0 0.0
      %1748 = vmatprep.subr.mxu0 0.0
      %1749 = vmatpush1.msra.mxu0 0.0
      %1750 = vmatprep.subr.mxu0 0.0
      %1751 = vmatpush1.msra.mxu0 0.0
      %1752 = vmatprep.subr.mxu0 0.0
      %1753 = vmatpush1.msra.mxu0 0.0
      %1754 = vmatprep.subr.mxu0 0.0
      %1755 = vmatpush1.msra.mxu0 0.0
      %1756 = vmatprep.subr.mxu0 0.0
      %1757 = vmatpush1.msra.mxu0 0.0
      %1758 = vmatprep.subr.mxu0 0.0
      %1759 = vmatpush1.msra.mxu0 0.0
      %1760 = vmatprep.subr.mxu0 0.0
      %1761 = vmatpush1.msra.mxu0 0.0
      %1762 = vmatprep.subr.mxu0 0.0
      %1763 = vmatpush1.msra.mxu0 0.0
      %1764 = vmatprep.subr.mxu0 0.0
      %1765 = vmatpush1.msra.mxu0 0.0
      %1766 = vmatprep.subr.mxu0 0.0
      %1767 = vmatpush1.msra.mxu0 0.0
      %1768 = vmatprep.subr.mxu0 0.0
      %1769 = vmatpush1.msra.mxu0 0.0
      %1770 = vmatprep.subr.mxu0 0.0
      %1771 = vmatpush1.msra.mxu0 0.0
      %1772 = vmatprep.subr.mxu0 0.0
      %1773 = vmatpush1.msra.mxu0 0.0
      %1774 = vmatprep.subr.mxu0 0.0
      %1775 = vmatpush1.msra.mxu0 0.0
      %1776 = vmatprep.subr.mxu0 0.0
      %1777 = vmatpush1.msra.mxu0 0.0
      %1778 = vmatprep.mubr.f32.mxu0 0.0
      %1779 = vmatmul.mubr.f32.gmra.mrb[0].mxu0 %v1709
      %v1780 = vpop.f32.mrb[0].mxu0
      %v1781 = vadd.f32 %v1673, %v1780
      %v1782 = vpop.f32.mrb[0].mxu0
      %1783 = vdwg.mxu0
      %v1785 = vsel %vm281, %v1304, 0
      %v1788 = vsel %vm281, %v1305, 0
      %v1791 = vsel %vm281, %v1781, 0
      %1793 = vmatprep.subr.mxu0 0.0
      %1794 = vmatpush1.xpose.msra.mxu0 %v1791
      %1795 = vmatprep.subr.mxu0 0.0
      %1796 = vmatpush1.xpose.msra.mxu0 0.0
      %1797 = vmatprep.subr.mxu0 0.0
      %1798 = vmatpush1.xpose.msra.mxu0 0.0
      %1799 = vmatprep.subr.mxu0 0.0
      %1800 = vmatpush1.xpose.msra.mxu0 0.0
      %1801 = vmatprep.subr.mxu0 0.0
      %1802 = vmatpush1.xpose.msra.mxu0 0.0
      %1803 = vmatprep.subr.mxu0 0.0
      %1804 = vmatpush1.xpose.msra.mxu0 0.0
      %1805 = vmatprep.subr.mxu0 0.0
      %1806 = vmatpush1.xpose.msra.mxu0 0.0
      %1807 = vmatprep.subr.mxu0 0.0
      %1808 = vmatpush1.xpose.msra.mxu0 0.0
      %1809 = vmatprep.subr.mxu0 0.0
      %1810 = vmatpush1.xpose.msra.mxu0 0.0
      %1811 = vmatprep.subr.mxu0 0.0
      %1812 = vmatpush1.xpose.msra.mxu0 0.0
      %1813 = vmatprep.subr.mxu0 0.0
      %1814 = vmatpush1.xpose.msra.mxu0 0.0
      %1815 = vmatprep.subr.mxu0 0.0
      %1816 = vmatpush1.xpose.msra.mxu0 0.0
      %1817 = vmatprep.subr.mxu0 0.0
      %1818 = vmatpush1.xpose.msra.mxu0 0.0
      %1819 = vmatprep.subr.mxu0 0.0
      %1820 = vmatpush1.xpose.msra.mxu0 0.0
      %1821 = vmatprep.subr.mxu0 0.0
      %1822 = vmatpush1.xpose.msra.mxu0 0.0
      %1823 = vmatprep.subr.mxu0 0.0
      %1824 = vmatpush1.xpose.msra.mxu0 0.0
      %1825 = vmatprep.subr.mxu0 0.0
      %1826 = vmatpush1.xpose.msra.mxu0 0.0
      %1827 = vmatprep.subr.mxu0 0.0
      %1828 = vmatpush1.xpose.msra.mxu0 0.0
      %1829 = vmatprep.subr.mxu0 0.0
      %1830 = vmatpush1.xpose.msra.mxu0 0.0
      %1831 = vmatprep.subr.mxu0 0.0
      %1832 = vmatpush1.xpose.msra.mxu0 0.0
      %1833 = vmatprep.subr.mxu0 0.0
      %1834 = vmatpush1.xpose.msra.mxu0 0.0
      %1835 = vmatprep.subr.mxu0 0.0
      %1836 = vmatpush1.xpose.msra.mxu0 0.0
      %1837 = vmatprep.subr.mxu0 0.0
      %1838 = vmatpush1.xpose.msra.mxu0 0.0
      %1839 = vmatprep.subr.mxu0 0.0
      %1840 = vmatpush1.xpose.msra.mxu0 0.0
      %1841 = vmatprep.subr.mxu0 0.0
      %1842 = vmatpush1.xpose.msra.mxu0 0.0
      %1843 = vmatprep.subr.mxu0 0.0
      %1844 = vmatpush1.xpose.msra.mxu0 0.0
      %1845 = vmatprep.subr.mxu0 0.0
      %1846 = vmatpush1.xpose.msra.mxu0 0.0
      %1847 = vmatprep.subr.mxu0 0.0
      %1848 = vmatpush1.xpose.msra.mxu0 0.0
      %1849 = vmatprep.subr.mxu0 0.0
      %1850 = vmatpush1.xpose.msra.mxu0 0.0
      %1851 = vmatprep.subr.mxu0 0.0
      %1852 = vmatpush1.xpose.msra.mxu0 0.0
      %1853 = vmatprep.subr.mxu0 0.0
      %1854 = vmatpush1.xpose.msra.mxu0 0.0
      %1855 = vmatprep.subr.mxu0 0.0
      %1856 = vmatpush1.xpose.msra.mxu0 0.0
      %1857 = vmatprep.mubr.f32.mxu0 0.0
      %1858 = vmatmul.mubr.f32.gmra.mrb[0].mxu0 %v1785
      %v1859 = vpop.f32.mrb[0].mxu0
      %v1860 = vadd.f32 0.0, %v1859
      %v1861 = vpop.f32.mrb[0].mxu0
      %1862 = vmatprep.mubr.f32.mxu0 0.0
      %1863 = vmatmul.mubr.f32.gmra.mrb[0].mxu0 %v1788
      %v1864 = vpop.f32.mrb[0].mxu0
      %v1865 = vadd.f32 0.0, %v1864
      %v1866 = vpop.f32.mrb[0].mxu0
      %1867 = vdwg.mxu0
      %v1868 = vmul.f32 %v1860, 0.125
      %v1869 = vmul.f32 %v1865, 0.125
      %v1870 = vadd.f32 %v1304, %v1868
      %v1871 = vadd.f32 %v1305, %v1869
      %1872 = vst.msk [vmem:[%s170] sm:$0xff] %vm281, %v1870
      %vm1873 = vcmask 32768
      %1874 = vst.msk [vmem:[%s170 + $0x8] sm:$0x1] %vm1873, %v1871
      %p1875 = scmp.lt.s32.totalorder %s14, 1
      %s1876 = scalar_select %p1875, %s14, 1
      %s1877 = smul.addr %s1876, 2
      %s1878 = smul.addr %s1877, 8
      %s1879 = scalar_lea.vmem %s3, %s1878
      // Predicated region
      $region33: #{tpu_custom_call.1} parent=31 // pred_check
        %p1880 = pneg %p100
      $region34: #{tpu_custom_call.1} parent=31 // pred_check_branch
        %1882 = sbr.rel (%p1880) target = $region36
      $region35: #{tpu_custom_call.1} parent=31 // pred_region
        _
      $region36: #{tpu_custom_call.1} parent=31 // pred_fallthru
        _
    $region32: #{tpu_custom_call.1} parent=5 // pred_fallthru
      _
    %p1883 = scmp.le.s32.totalorder 2, %s9
    // Predicated region
    $region37: #{tpu_custom_call.1} parent=5 // pred_check
      %p1884 = pneg %p1883
    $region38: #{tpu_custom_call.1} parent=5 // pred_check_branch
      %1886 = sbr.rel (%p1884) target = $region40
    $region39: #{tpu_custom_call.1} parent=5 // pred_region
      %s1887 = ssub.s32 %s9, 2
      // Predicated region
      $region41: #{tpu_custom_call.1} parent=39 // pred_check
        %p1888 = pneg %p106
      $region42: #{tpu_custom_call.1} parent=39 // pred_check_branch
        %1890 = sbr.rel (%p1888) target = $region44
      $region43: #{tpu_custom_call.1} parent=39 // pred_region
        %p1891 = scmp.lt.s32.totalorder %s15, 1
        %s1892 = scalar_select %p1891, %s15, 1
        %s1893 = smul.addr %s1892, 2
        %s1894 = smul.addr %s1893, 8
        %s1895 = scalar_lea.vmem %s3, %s1894
      $region44: #{tpu_custom_call.1} parent=39 // pred_fallthru
        _
    $region40: #{tpu_custom_call.1} parent=5 // pred_fallthru
      _
  $region6: #{tpu_custom_call.1} parent=0 // loop_footer
    %s13 = sadd.s32 1, %s9
  $region7: #{tpu_custom_call.1} parent=0 // loop_footer_branch
    %8 = sbr.rel target = $region3
  $region8: #{tpu_custom_call.1} parent=0 // loop_exit
    _

</llo_original>
